<compile_context>
chip_gen: v5e
topology: v5e:2x2
jax: 0.10.0
libtpu: 0.0.40
codegen_flags: <defaults>
</compile_context>

<pallas_src>
import numpy as np
import jax
import jax.numpy as jnp
from jax.experimental import pallas as pl
from jax.experimental.pallas import tpu as pltpu


# ----------------------------- Pallas kernel -------------------------------

def _fused_cnn_kernel(p1_ref, w1_ref, b1_ref, g_ref, w2_ref, b2_ref, o_ref):
    """Fused conv1(+bias,ReLU) -> conv2(+bias,ReLU).

    p1: (M1, K1)      conv1 im2col patches, columns ordered (kh, kw, c)  f32
    w1: (K1, C1)      conv1 weights, rows ordered (kh, kw, ic)           f32
    b1: (1,  C1)                                                          f32
    g : (T2, M2, M1)  constant 0/1 row-selection matrix per conv2 tap    bf16
    w2: (T2, C1, C2)  conv2 weights per tap (tap q = kh*K2 + kw)          f32
    b2: (1,  C2)                                                          f32
    o : (M2, C2)                                                          f32
    """
    # conv1: one MXU matmul; the activation stays resident in vregs/VMEM.
    h = jnp.dot(p1_ref[...], w1_ref[...], preferred_element_type=jnp.float32)
    h = jnp.maximum(h + b1_ref[...], 0.0)                       # (M1, C1)

    # conv2: sum over the K2*K2 taps.  Row selection (the im2col "gather") is
    # a matmul against a constant 0/1 matrix, channel contraction is another
    # matmul.  Loop is unrolled at trace time (16 taps).
    acc = jnp.zeros(o_ref.shape, jnp.float32)                   # (M2, C2)
    for q in range(g_ref.shape[0]):
        gq = g_ref[q].astype(jnp.float32)                       # bf16 -> f32 (VPU, exact)
        hq = jnp.dot(gq, h, preferred_element_type=jnp.float32)                 # (M2, C1)
        acc = acc + jnp.dot(hq, w2_ref[q], preferred_element_type=jnp.float32)  # (M2, C2)

    # Masked (32-of-128 lane) store; intentionally not padded -- see header.
    o_ref[...] = jnp.maximum(acc + b2_ref[...], 0.0)


def fused_cnn_call(p1, w1m, b1, g, w2m, b2):
    m2 = g.shape[1]
    c2 = w2m.shape[-1]
    vmem = lambda: pl.BlockSpec(memory_space=pltpu.MemorySpace.VMEM)
    return pl.pallas_call(
        _fused_cnn_kernel,
        out_shape=jax.ShapeDtypeStruct((m2, c2), jnp.float32),
        in_specs=[vmem() for _ in range(6)],
        out_specs=vmem(),
    )(p1, w1m, b1, g, w2m, b2)


# ----------------------------- JAX glue (im2col etc.) -----------------------

def extract_patches_khw_c(x_nhwc, kh, kw, stride):
    """(N,H,W,C) -> (N*OH*OW, KH*KW*C) patches, columns ordered (kh, kw, c).

    Only a cheap middle-axis swap is needed (no 6-D relayout touching C)."""
    n, h, w, c = x_nhwc.shape
    oh = (h - kh) // stride + 1
    ow = (w - kw) // stride + 1
    idx_h = (jnp.arange(oh) * stride)[:, None] + jnp.arange(kh)[None, :]  # (oh, kh)
    idx_w = (jnp.arange(ow) * stride)[:, None] + jnp.arange(kw)[None, :]  # (ow, kw)
    p = x_nhwc[:, idx_h]                        # (n, oh, kh, W, c)
    p = p[:, :, :, idx_w]                       # (n, oh, kh, ow, kw, c)
    p = jnp.transpose(p, (0, 1, 3, 2, 4, 5))    # (n, oh, ow, kh, kw, c)
    return p.reshape(n * oh * ow, kh * kw * c), oh, ow


def _build_tap_selectors(n, oh1, ow1, oh2, ow2, k, s):
    """0/1 matrices g[q, m2, m1] selecting conv1-output rows for conv2 tap q.

    Built with numpy from static shapes -> a trace-time constant under jit.
    Stored in bf16 (0/1 exactly representable) to halve HBM traffic."""
    m1 = n * oh1 * ow1
    m2 = n * oh2 * ow2
    g = np.zeros((k * k, m2, m1), np.float32)
    for b in range(n):
        for i in range(oh2):
            for j in range(ow2):
                m = (b * oh2 + i) * ow2 + j
                for r in range(k):
                    for t in range(k):
                        q = r * k + t
                        p = (b * oh1 + (i * s + r)) * ow1 + (j * s + t)
                        g[q, m, p] = 1.0
    return jnp.asarray(g, dtype=jnp.bfloat16)


def cnn_forward(x_nchw, params):
    w1, b1, w2, b2 = params
    n = x_nchw.shape[0]
    c1_out, c_in, k1, _ = w1.shape          # (16, 3, 8, 8)
    c2_out, _, k2, _ = w2.shape             # (32, 16, 4, 4)
    s1, s2 = 4, 2

    x = jnp.transpose(x_nchw, (0, 2, 3, 1))                     # NCHW -> NHWC
    p1, oh1, ow1 = extract_patches_khw_c(x, k1, k1, s1)         # (n*oh1*ow1, k1*k1*c_in)
    oh2 = (oh1 - k2) // s2 + 1
    ow2 = (ow1 - k2) // s2 + 1

    # Permute the tiny weight tensors instead of the activation patches.
    w1m = jnp.transpose(w1, (2, 3, 1, 0)).reshape(k1 * k1 * c_in, c1_out)
    w2m = jnp.transpose(w2, (2, 3, 1, 0)).reshape(k2 * k2, c1_out, c2_out)

    g = _build_tap_selectors(n, oh1, ow1, oh2, ow2, k2, s2)

    y = fused_cnn_call(
        p1.astype(jnp.float32),
        w1m.astype(jnp.float32),
        b1.reshape(1, -1).astype(jnp.float32),
        g,
        w2m.astype(jnp.float32),
        b2.reshape(1, -1).astype(jnp.float32),
    )                                                            # (n*oh2*ow2, c2)
    y = y.reshape(n, oh2, ow2, c2_out)
    return jnp.transpose(y, (0, 3, 1, 2))                        # NHWC -> NCHW


# ----------------------------- Reference (plain JAX) ------------------------

def cnn_reference(x_nchw, params):
    w1, b1, w2, b2 = params

    def conv(x, w, b, s):
        y = jax.lax.conv_general_dilated(
            x, w, window_strides=(s, s), padding='VALID',
            dimension_numbers=('NCHW', 'OIHW', 'NCHW'))
        return jnp.maximum(y + b[None, :, None, None], 0.0)

    return conv(conv(x_nchw, w1, b1, 4), w2, b2, 2)


# ----------------------------- Main -----------------------------------------

if __name__ == "__main__":
    key = jax.random.PRNGKey(0)
    k_x, k_w1, k_b1, k_w2, k_b2 = jax.random.split(key, 5)

    # NCHW input consistent with the module: (2, 3, 36, 36) -> (2, 32, 3, 3)
    x = jax.random.normal(k_x, (2, 3, 36, 36), dtype=jnp.float32)

    # PyTorch conv weight layout: OIHW.
    w1 = jax.random.normal(k_w1, (16, 3, 8, 8), dtype=jnp.float32) * 0.05
    b1 = jax.random.normal(k_b1, (16,), dtype=jnp.float32) * 0.05
    w2 = jax.random.normal(k_w2, (32, 16, 4, 4), dtype=jnp.float32) * 0.05
    b2 = jax.random.normal(k_b2, (32,), dtype=jnp.float32) * 0.05
    params = (w1, b1, w2, b2)

    fwd = jax.jit(cnn_forward)
    out = jax.block_until_ready(fwd(x, params))

    ref = jax.block_until_ready(cnn_reference(x, params))
    assert out.shape == (2, 32, 3, 3), out.shape
    assert jnp.allclose(out, ref, atol=1e-4, rtol=1e-4), "mismatch vs reference"

    print("KERNEL_OK")
</pallas_src>

<mosaic_0001>
module attributes {stable_mosaic.version = 11 : i64} {
  func.func @_fused_cnn_kernel(%arg0: memref<128x192xf32, #tpu.memory_space<vmem>>, %arg1: memref<192x16xf32, #tpu.memory_space<vmem>>, %arg2: memref<1x16xf32, #tpu.memory_space<vmem>>, %arg3: memref<16x18x128xbf16, #tpu.memory_space<vmem>>, %arg4: memref<16x16x32xf32, #tpu.memory_space<vmem>>, %arg5: memref<1x32xf32, #tpu.memory_space<vmem>>, %arg6: memref<18x32xf32, #tpu.memory_space<vmem>>) attributes {dimension_semantics = [], scalar_prefetch = 0 : i64, scratch_operands = 0 : i64, tpu.core_type = #tpu.core_type<tc>} {
    %c0 = arith.constant 0 : index
    %c0_0 = arith.constant 0 : index
    %0 = vector.load %arg0[%c0, %c0_0] : memref<128x192xf32, #tpu.memory_space<vmem>>, vector<128x192xf32>
    %c0_1 = arith.constant 0 : index
    %c0_2 = arith.constant 0 : index
    %1 = vector.load %arg1[%c0_1, %c0_2] : memref<192x16xf32, #tpu.memory_space<vmem>>, vector<192x16xf32>
    %cst = arith.constant dense<0.000000e+00> : vector<128x16xf32>
    %2 = tpu.matmul %0, %1, %cst {dimension_numbers = #tpu.dot_dimension_numbers<[1], [0], [0], [1], [0, 0, 1, 1], [], []>} : vector<128x192xf32>, vector<192x16xf32>, vector<128x16xf32> -> vector<128x16xf32>
    %c0_3 = arith.constant 0 : index
    %c0_4 = arith.constant 0 : index
    %3 = vector.load %arg2[%c0_3, %c0_4] : memref<1x16xf32, #tpu.memory_space<vmem>>, vector<1x16xf32>
    %4 = vector.broadcast %3 : vector<1x16xf32> to vector<128x16xf32>
    %5 = arith.addf %2, %4 : vector<128x16xf32>
    %cst_5 = arith.constant 0.000000e+00 : f32
    %6 = vector.broadcast %cst_5 : f32 to vector<128x16xf32>
    %7 = arith.maximumf %5, %6 : vector<128x16xf32>
    %cst_6 = arith.constant 0.000000e+00 : f32
    %8 = vector.broadcast %cst_6 : f32 to vector<18x32xf32>
    %c0_7 = arith.constant 0 : index
    %c0_8 = arith.constant 0 : index
    %c0_9 = arith.constant 0 : index
    %9 = vector.load %arg3[%c0_7, %c0_8, %c0_9] : memref<16x18x128xbf16, #tpu.memory_space<vmem>>, vector<1x18x128xbf16>
    %10 = vector.shape_cast %9 : vector<1x18x128xbf16> to vector<18x128xbf16>
    %11 = arith.extf %10 : vector<18x128xbf16> to vector<18x128xf32>
    %cst_10 = arith.constant dense<0.000000e+00> : vector<18x16xf32>
    %12 = tpu.matmul %11, %7, %cst_10 {dimension_numbers = #tpu.dot_dimension_numbers<[1], [0], [0], [1], [0, 0, 1, 1], [], []>} : vector<18x128xf32>, vector<128x16xf32>, vector<18x16xf32> -> vector<18x16xf32>
    %c0_11 = arith.constant 0 : index
    %c0_12 = arith.constant 0 : index
    %c0_13 = arith.constant 0 : index
    %13 = vector.load %arg4[%c0_11, %c0_12, %c0_13] : memref<16x16x32xf32, #tpu.memory_space<vmem>>, vector<1x16x32xf32>
    %14 = vector.shape_cast %13 : vector<1x16x32xf32> to vector<16x32xf32>
    %cst_14 = arith.constant dense<0.000000e+00> : vector<18x32xf32>
    %15 = tpu.matmul %12, %14, %cst_14 {dimension_numbers = #tpu.dot_dimension_numbers<[1], [0], [0], [1], [0, 0, 1, 1], [], []>} : vector<18x16xf32>, vector<16x32xf32>, vector<18x32xf32> -> vector<18x32xf32>
    %16 = arith.addf %8, %15 : vector<18x32xf32>
    %c1 = arith.constant 1 : index
    %c0_15 = arith.constant 0 : index
    %c0_16 = arith.constant 0 : index
    %17 = vector.load %arg3[%c1, %c0_15, %c0_16] : memref<16x18x128xbf16, #tpu.memory_space<vmem>>, vector<1x18x128xbf16>
    %18 = vector.shape_cast %17 : vector<1x18x128xbf16> to vector<18x128xbf16>
    %19 = arith.extf %18 : vector<18x128xbf16> to vector<18x128xf32>
    %cst_17 = arith.constant dense<0.000000e+00> : vector<18x16xf32>
    %20 = tpu.matmul %19, %7, %cst_17 {dimension_numbers = #tpu.dot_dimension_numbers<[1], [0], [0], [1], [0, 0, 1, 1], [], []>} : vector<18x128xf32>, vector<128x16xf32>, vector<18x16xf32> -> vector<18x16xf32>
    %c1_18 = arith.constant 1 : index
    %c0_19 = arith.constant 0 : index
    %c0_20 = arith.constant 0 : index
    %21 = vector.load %arg4[%c1_18, %c0_19, %c0_20] : memref<16x16x32xf32, #tpu.memory_space<vmem>>, vector<1x16x32xf32>
    %22 = vector.shape_cast %21 : vector<1x16x32xf32> to vector<16x32xf32>
    %cst_21 = arith.constant dense<0.000000e+00> : vector<18x32xf32>
    %23 = tpu.matmul %20, %22, %cst_21 {dimension_numbers = #tpu.dot_dimension_numbers<[1], [0], [0], [1], [0, 0, 1, 1], [], []>} : vector<18x16xf32>, vector<16x32xf32>, vector<18x32xf32> -> vector<18x32xf32>
    %24 = arith.addf %16, %23 : vector<18x32xf32>
    %c2 = arith.constant 2 : index
    %c0_22 = arith.constant 0 : index
    %c0_23 = arith.constant 0 : index
    %25 = vector.load %arg3[%c2, %c0_22, %c0_23] : memref<16x18x128xbf16, #tpu.memory_space<vmem>>, vector<1x18x128xbf16>
    %26 = vector.shape_cast %25 : vector<1x18x128xbf16> to vector<18x128xbf16>
    %27 = arith.extf %26 : vector<18x128xbf16> to vector<18x128xf32>
    %cst_24 = arith.constant dense<0.000000e+00> : vector<18x16xf32>
    %28 = tpu.matmul %27, %7, %cst_24 {dimension_numbers = #tpu.dot_dimension_numbers<[1], [0], [0], [1], [0, 0, 1, 1], [], []>} : vector<18x128xf32>, vector<128x16xf32>, vector<18x16xf32> -> vector<18x16xf32>
    %c2_25 = arith.constant 2 : index
    %c0_26 = arith.constant 0 : index
    %c0_27 = arith.constant 0 : index
    %29 = vector.load %arg4[%c2_25, %c0_26, %c0_27] : memref<16x16x32xf32, #tpu.memory_space<vmem>>, vector<1x16x32xf32>
    %30 = vector.shape_cast %29 : vector<1x16x32xf32> to vector<16x32xf32>
    %cst_28 = arith.constant dense<0.000000e+00> : vector<18x32xf32>
    %31 = tpu.matmul %28, %30, %cst_28 {dimension_numbers = #tpu.dot_dimension_numbers<[1], [0], [0], [1], [0, 0, 1, 1], [], []>} : vector<18x16xf32>, vector<16x32xf32>, vector<18x32xf32> -> vector<18x32xf32>
    %32 = arith.addf %24, %31 : vector<18x32xf32>
    %c3 = arith.constant 3 : index
    %c0_29 = arith.constant 0 : index
    %c0_30 = arith.constant 0 : index
    %33 = vector.load %arg3[%c3, %c0_29, %c0_30] : memref<16x18x128xbf16, #tpu.memory_space<vmem>>, vector<1x18x128xbf16>
    %34 = vector.shape_cast %33 : vector<1x18x128xbf16> to vector<18x128xbf16>
    %35 = arith.extf %34 : vector<18x128xbf16> to vector<18x128xf32>
    %cst_31 = arith.constant dense<0.000000e+00> : vector<18x16xf32>
    %36 = tpu.matmul %35, %7, %cst_31 {dimension_numbers = #tpu.dot_dimension_numbers<[1], [0], [0], [1], [0, 0, 1, 1], [], []>} : vector<18x128xf32>, vector<128x16xf32>, vector<18x16xf32> -> vector<18x16xf32>
    %c3_32 = arith.constant 3 : index
    %c0_33 = arith.constant 0 : index
    %c0_34 = arith.constant 0 : index
    %37 = vector.load %arg4[%c3_32, %c0_33, %c0_34] : memref<16x16x32xf32, #tpu.memory_space<vmem>>, vector<1x16x32xf32>
    %38 = vector.shape_cast %37 : vector<1x16x32xf32> to vector<16x32xf32>
    %cst_35 = arith.constant dense<0.000000e+00> : vector<18x32xf32>
    %39 = tpu.matmul %36, %38, %cst_35 {dimension_numbers = #tpu.dot_dimension_numbers<[1], [0], [0], [1], [0, 0, 1, 1], [], []>} : vector<18x16xf32>, vector<16x32xf32>, vector<18x32xf32> -> vector<18x32xf32>
    %40 = arith.addf %32, %39 : vector<18x32xf32>
    %c4 = arith.constant 4 : index
    %c0_36 = arith.constant 0 : index
    %c0_37 = arith.constant 0 : index
    %41 = vector.load %arg3[%c4, %c0_36, %c0_37] : memref<16x18x128xbf16, #tpu.memory_space<vmem>>, vector<1x18x128xbf16>
    %42 = vector.shape_cast %41 : vector<1x18x128xbf16> to vector<18x128xbf16>
    %43 = arith.extf %42 : vector<18x128xbf16> to vector<18x128xf32>
    %cst_38 = arith.constant dense<0.000000e+00> : vector<18x16xf32>
    %44 = tpu.matmul %43, %7, %cst_38 {dimension_numbers = #tpu.dot_dimension_numbers<[1], [0], [0], [1], [0, 0, 1, 1], [], []>} : vector<18x128xf32>, vector<128x16xf32>, vector<18x16xf32> -> vector<18x16xf32>
    %c4_39 = arith.constant 4 : index
    %c0_40 = arith.constant 0 : index
    %c0_41 = arith.constant 0 : index
    %45 = vector.load %arg4[%c4_39, %c0_40, %c0_41] : memref<16x16x32xf32, #tpu.memory_space<vmem>>, vector<1x16x32xf32>
    %46 = vector.shape_cast %45 : vector<1x16x32xf32> to vector<16x32xf32>
    %cst_42 = arith.constant dense<0.000000e+00> : vector<18x32xf32>
    %47 = tpu.matmul %44, %46, %cst_42 {dimension_numbers = #tpu.dot_dimension_numbers<[1], [0], [0], [1], [0, 0, 1, 1], [], []>} : vector<18x16xf32>, vector<16x32xf32>, vector<18x32xf32> -> vector<18x32xf32>
    %48 = arith.addf %40, %47 : vector<18x32xf32>
    %c5 = arith.constant 5 : index
    %c0_43 = arith.constant 0 : index
    %c0_44 = arith.constant 0 : index
    %49 = vector.load %arg3[%c5, %c0_43, %c0_44] : memref<16x18x128xbf16, #tpu.memory_space<vmem>>, vector<1x18x128xbf16>
    %50 = vector.shape_cast %49 : vector<1x18x128xbf16> to vector<18x128xbf16>
    %51 = arith.extf %50 : vector<18x128xbf16> to vector<18x128xf32>
    %cst_45 = arith.constant dense<0.000000e+00> : vector<18x16xf32>
    %52 = tpu.matmul %51, %7, %cst_45 {dimension_numbers = #tpu.dot_dimension_numbers<[1], [0], [0], [1], [0, 0, 1, 1], [], []>} : vector<18x128xf32>, vector<128x16xf32>, vector<18x16xf32> -> vector<18x16xf32>
    %c5_46 = arith.constant 5 : index
    %c0_47 = arith.constant 0 : index
    %c0_48 = arith.constant 0 : index
    %53 = vector.load %arg4[%c5_46, %c0_47, %c0_48] : memref<16x16x32xf32, #tpu.memory_space<vmem>>, vector<1x16x32xf32>
    %54 = vector.shape_cast %53 : vector<1x16x32xf32> to vector<16x32xf32>
    %cst_49 = arith.constant dense<0.000000e+00> : vector<18x32xf32>
    %55 = tpu.matmul %52, %54, %cst_49 {dimension_numbers = #tpu.dot_dimension_numbers<[1], [0], [0], [1], [0, 0, 1, 1], [], []>} : vector<18x16xf32>, vector<16x32xf32>, vector<18x32xf32> -> vector<18x32xf32>
    %56 = arith.addf %48, %55 : vector<18x32xf32>
    %c6 = arith.constant 6 : index
    %c0_50 = arith.constant 0 : index
    %c0_51 = arith.constant 0 : index
    %57 = vector.load %arg3[%c6, %c0_50, %c0_51] : memref<16x18x128xbf16, #tpu.memory_space<vmem>>, vector<1x18x128xbf16>
    %58 = vector.shape_cast %57 : vector<1x18x128xbf16> to vector<18x128xbf16>
    %59 = arith.extf %58 : vector<18x128xbf16> to vector<18x128xf32>
    %cst_52 = arith.constant dense<0.000000e+00> : vector<18x16xf32>
    %60 = tpu.matmul %59, %7, %cst_52 {dimension_numbers = #tpu.dot_dimension_numbers<[1], [0], [0], [1], [0, 0, 1, 1], [], []>} : vector<18x128xf32>, vector<128x16xf32>, vector<18x16xf32> -> vector<18x16xf32>
    %c6_53 = arith.constant 6 : index
    %c0_54 = arith.constant 0 : index
    %c0_55 = arith.constant 0 : index
    %61 = vector.load %arg4[%c6_53, %c0_54, %c0_55] : memref<16x16x32xf32, #tpu.memory_space<vmem>>, vector<1x16x32xf32>
    %62 = vector.shape_cast %61 : vector<1x16x32xf32> to vector<16x32xf32>
    %cst_56 = arith.constant dense<0.000000e+00> : vector<18x32xf32>
    %63 = tpu.matmul %60, %62, %cst_56 {dimension_numbers = #tpu.dot_dimension_numbers<[1], [0], [0], [1], [0, 0, 1, 1], [], []>} : vector<18x16xf32>, vector<16x32xf32>, vector<18x32xf32> -> vector<18x32xf32>
    %64 = arith.addf %56, %63 : vector<18x32xf32>
    %c7 = arith.constant 7 : index
    %c0_57 = arith.constant 0 : index
    %c0_58 = arith.constant 0 : index
    %65 = vector.load %arg3[%c7, %c0_57, %c0_58] : memref<16x18x128xbf16, #tpu.memory_space<vmem>>, vector<1x18x128xbf16>
    %66 = vector.shape_cast %65 : vector<1x18x128xbf16> to vector<18x128xbf16>
    %67 = arith.extf %66 : vector<18x128xbf16> to vector<18x128xf32>
    %cst_59 = arith.constant dense<0.000000e+00> : vector<18x16xf32>
    %68 = tpu.matmul %67, %7, %cst_59 {dimension_numbers = #tpu.dot_dimension_numbers<[1], [0], [0], [1], [0, 0, 1, 1], [], []>} : vector<18x128xf32>, vector<128x16xf32>, vector<18x16xf32> -> vector<18x16xf32>
    %c7_60 = arith.constant 7 : index
    %c0_61 = arith.constant 0 : index
    %c0_62 = arith.constant 0 : index
    %69 = vector.load %arg4[%c7_60, %c0_61, %c0_62] : memref<16x16x32xf32, #tpu.memory_space<vmem>>, vector<1x16x32xf32>
    %70 = vector.shape_cast %69 : vector<1x16x32xf32> to vector<16x32xf32>
    %cst_63 = arith.constant dense<0.000000e+00> : vector<18x32xf32>
    %71 = tpu.matmul %68, %70, %cst_63 {dimension_numbers = #tpu.dot_dimension_numbers<[1], [0], [0], [1], [0, 0, 1, 1], [], []>} : vector<18x16xf32>, vector<16x32xf32>, vector<18x32xf32> -> vector<18x32xf32>
    %72 = arith.addf %64, %71 : vector<18x32xf32>
    %c8 = arith.constant 8 : index
    %c0_64 = arith.constant 0 : index
    %c0_65 = arith.constant 0 : index
    %73 = vector.load %arg3[%c8, %c0_64, %c0_65] : memref<16x18x128xbf16, #tpu.memory_space<vmem>>, vector<1x18x128xbf16>
    %74 = vector.shape_cast %73 : vector<1x18x128xbf16> to vector<18x128xbf16>
    %75 = arith.extf %74 : vector<18x128xbf16> to vector<18x128xf32>
    %cst_66 = arith.constant dense<0.000000e+00> : vector<18x16xf32>
    %76 = tpu.matmul %75, %7, %cst_66 {dimension_numbers = #tpu.dot_dimension_numbers<[1], [0], [0], [1], [0, 0, 1, 1], [], []>} : vector<18x128xf32>, vector<128x16xf32>, vector<18x16xf32> -> vector<18x16xf32>
    %c8_67 = arith.constant 8 : index
    %c0_68 = arith.constant 0 : index
    %c0_69 = arith.constant 0 : index
    %77 = vector.load %arg4[%c8_67, %c0_68, %c0_69] : memref<16x16x32xf32, #tpu.memory_space<vmem>>, vector<1x16x32xf32>
    %78 = vector.shape_cast %77 : vector<1x16x32xf32> to vector<16x32xf32>
    %cst_70 = arith.constant dense<0.000000e+00> : vector<18x32xf32>
    %79 = tpu.matmul %76, %78, %cst_70 {dimension_numbers = #tpu.dot_dimension_numbers<[1], [0], [0], [1], [0, 0, 1, 1], [], []>} : vector<18x16xf32>, vector<16x32xf32>, vector<18x32xf32> -> vector<18x32xf32>
    %80 = arith.addf %72, %79 : vector<18x32xf32>
    %c9 = arith.constant 9 : index
    %c0_71 = arith.constant 0 : index
    %c0_72 = arith.constant 0 : index
    %81 = vector.load %arg3[%c9, %c0_71, %c0_72] : memref<16x18x128xbf16, #tpu.memory_space<vmem>>, vector<1x18x128xbf16>
    %82 = vector.shape_cast %81 : vector<1x18x128xbf16> to vector<18x128xbf16>
    %83 = arith.extf %82 : vector<18x128xbf16> to vector<18x128xf32>
    %cst_73 = arith.constant dense<0.000000e+00> : vector<18x16xf32>
    %84 = tpu.matmul %83, %7, %cst_73 {dimension_numbers = #tpu.dot_dimension_numbers<[1], [0], [0], [1], [0, 0, 1, 1], [], []>} : vector<18x128xf32>, vector<128x16xf32>, vector<18x16xf32> -> vector<18x16xf32>
    %c9_74 = arith.constant 9 : index
    %c0_75 = arith.constant 0 : index
    %c0_76 = arith.constant 0 : index
    %85 = vector.load %arg4[%c9_74, %c0_75, %c0_76] : memref<16x16x32xf32, #tpu.memory_space<vmem>>, vector<1x16x32xf32>
    %86 = vector.shape_cast %85 : vector<1x16x32xf32> to vector<16x32xf32>
    %cst_77 = arith.constant dense<0.000000e+00> : vector<18x32xf32>
    %87 = tpu.matmul %84, %86, %cst_77 {dimension_numbers = #tpu.dot_dimension_numbers<[1], [0], [0], [1], [0, 0, 1, 1], [], []>} : vector<18x16xf32>, vector<16x32xf32>, vector<18x32xf32> -> vector<18x32xf32>
    %88 = arith.addf %80, %87 : vector<18x32xf32>
    %c10 = arith.constant 10 : index
    %c0_78 = arith.constant 0 : index
    %c0_79 = arith.constant 0 : index
    %89 = vector.load %arg3[%c10, %c0_78, %c0_79] : memref<16x18x128xbf16, #tpu.memory_space<vmem>>, vector<1x18x128xbf16>
    %90 = vector.shape_cast %89 : vector<1x18x128xbf16> to vector<18x128xbf16>
    %91 = arith.extf %90 : vector<18x128xbf16> to vector<18x128xf32>
    %cst_80 = arith.constant dense<0.000000e+00> : vector<18x16xf32>
    %92 = tpu.matmul %91, %7, %cst_80 {dimension_numbers = #tpu.dot_dimension_numbers<[1], [0], [0], [1], [0, 0, 1, 1], [], []>} : vector<18x128xf32>, vector<128x16xf32>, vector<18x16xf32> -> vector<18x16xf32>
    %c10_81 = arith.constant 10 : index
    %c0_82 = arith.constant 0 : index
    %c0_83 = arith.constant 0 : index
    %93 = vector.load %arg4[%c10_81, %c0_82, %c0_83] : memref<16x16x32xf32, #tpu.memory_space<vmem>>, vector<1x16x32xf32>
    %94 = vector.shape_cast %93 : vector<1x16x32xf32> to vector<16x32xf32>
    %cst_84 = arith.constant dense<0.000000e+00> : vector<18x32xf32>
    %95 = tpu.matmul %92, %94, %cst_84 {dimension_numbers = #tpu.dot_dimension_numbers<[1], [0], [0], [1], [0, 0, 1, 1], [], []>} : vector<18x16xf32>, vector<16x32xf32>, vector<18x32xf32> -> vector<18x32xf32>
    %96 = arith.addf %88, %95 : vector<18x32xf32>
    %c11 = arith.constant 11 : index
    %c0_85 = arith.constant 0 : index
    %c0_86 = arith.constant 0 : index
    %97 = vector.load %arg3[%c11, %c0_85, %c0_86] : memref<16x18x128xbf16, #tpu.memory_space<vmem>>, vector<1x18x128xbf16>
    %98 = vector.shape_cast %97 : vector<1x18x128xbf16> to vector<18x128xbf16>
    %99 = arith.extf %98 : vector<18x128xbf16> to vector<18x128xf32>
    %cst_87 = arith.constant dense<0.000000e+00> : vector<18x16xf32>
    %100 = tpu.matmul %99, %7, %cst_87 {dimension_numbers = #tpu.dot_dimension_numbers<[1], [0], [0], [1], [0, 0, 1, 1], [], []>} : vector<18x128xf32>, vector<128x16xf32>, vector<18x16xf32> -> vector<18x16xf32>
    %c11_88 = arith.constant 11 : index
    %c0_89 = arith.constant 0 : index
    %c0_90 = arith.constant 0 : index
    %101 = vector.load %arg4[%c11_88, %c0_89, %c0_90] : memref<16x16x32xf32, #tpu.memory_space<vmem>>, vector<1x16x32xf32>
    %102 = vector.shape_cast %101 : vector<1x16x32xf32> to vector<16x32xf32>
    %cst_91 = arith.constant dense<0.000000e+00> : vector<18x32xf32>
    %103 = tpu.matmul %100, %102, %cst_91 {dimension_numbers = #tpu.dot_dimension_numbers<[1], [0], [0], [1], [0, 0, 1, 1], [], []>} : vector<18x16xf32>, vector<16x32xf32>, vector<18x32xf32> -> vector<18x32xf32>
    %104 = arith.addf %96, %103 : vector<18x32xf32>
    %c12 = arith.constant 12 : index
    %c0_92 = arith.constant 0 : index
    %c0_93 = arith.constant 0 : index
    %105 = vector.load %arg3[%c12, %c0_92, %c0_93] : memref<16x18x128xbf16, #tpu.memory_space<vmem>>, vector<1x18x128xbf16>
    %106 = vector.shape_cast %105 : vector<1x18x128xbf16> to vector<18x128xbf16>
    %107 = arith.extf %106 : vector<18x128xbf16> to vector<18x128xf32>
    %cst_94 = arith.constant dense<0.000000e+00> : vector<18x16xf32>
    %108 = tpu.matmul %107, %7, %cst_94 {dimension_numbers = #tpu.dot_dimension_numbers<[1], [0], [0], [1], [0, 0, 1, 1], [], []>} : vector<18x128xf32>, vector<128x16xf32>, vector<18x16xf32> -> vector<18x16xf32>
    %c12_95 = arith.constant 12 : index
    %c0_96 = arith.constant 0 : index
    %c0_97 = arith.constant 0 : index
    %109 = vector.load %arg4[%c12_95, %c0_96, %c0_97] : memref<16x16x32xf32, #tpu.memory_space<vmem>>, vector<1x16x32xf32>
    %110 = vector.shape_cast %109 : vector<1x16x32xf32> to vector<16x32xf32>
    %cst_98 = arith.constant dense<0.000000e+00> : vector<18x32xf32>
    %111 = tpu.matmul %108, %110, %cst_98 {dimension_numbers = #tpu.dot_dimension_numbers<[1], [0], [0], [1], [0, 0, 1, 1], [], []>} : vector<18x16xf32>, vector<16x32xf32>, vector<18x32xf32> -> vector<18x32xf32>
    %112 = arith.addf %104, %111 : vector<18x32xf32>
    %c13 = arith.constant 13 : index
    %c0_99 = arith.constant 0 : index
    %c0_100 = arith.constant 0 : index
    %113 = vector.load %arg3[%c13, %c0_99, %c0_100] : memref<16x18x128xbf16, #tpu.memory_space<vmem>>, vector<1x18x128xbf16>
    %114 = vector.shape_cast %113 : vector<1x18x128xbf16> to vector<18x128xbf16>
    %115 = arith.extf %114 : vector<18x128xbf16> to vector<18x128xf32>
    %cst_101 = arith.constant dense<0.000000e+00> : vector<18x16xf32>
    %116 = tpu.matmul %115, %7, %cst_101 {dimension_numbers = #tpu.dot_dimension_numbers<[1], [0], [0], [1], [0, 0, 1, 1], [], []>} : vector<18x128xf32>, vector<128x16xf32>, vector<18x16xf32> -> vector<18x16xf32>
    %c13_102 = arith.constant 13 : index
    %c0_103 = arith.constant 0 : index
    %c0_104 = arith.constant 0 : index
    %117 = vector.load %arg4[%c13_102, %c0_103, %c0_104] : memref<16x16x32xf32, #tpu.memory_space<vmem>>, vector<1x16x32xf32>
    %118 = vector.shape_cast %117 : vector<1x16x32xf32> to vector<16x32xf32>
    %cst_105 = arith.constant dense<0.000000e+00> : vector<18x32xf32>
    %119 = tpu.matmul %116, %118, %cst_105 {dimension_numbers = #tpu.dot_dimension_numbers<[1], [0], [0], [1], [0, 0, 1, 1], [], []>} : vector<18x16xf32>, vector<16x32xf32>, vector<18x32xf32> -> vector<18x32xf32>
    %120 = arith.addf %112, %119 : vector<18x32xf32>
    %c14 = arith.constant 14 : index
    %c0_106 = arith.constant 0 : index
    %c0_107 = arith.constant 0 : index
    %121 = vector.load %arg3[%c14, %c0_106, %c0_107] : memref<16x18x128xbf16, #tpu.memory_space<vmem>>, vector<1x18x128xbf16>
    %122 = vector.shape_cast %121 : vector<1x18x128xbf16> to vector<18x128xbf16>
    %123 = arith.extf %122 : vector<18x128xbf16> to vector<18x128xf32>
    %cst_108 = arith.constant dense<0.000000e+00> : vector<18x16xf32>
    %124 = tpu.matmul %123, %7, %cst_108 {dimension_numbers = #tpu.dot_dimension_numbers<[1], [0], [0], [1], [0, 0, 1, 1], [], []>} : vector<18x128xf32>, vector<128x16xf32>, vector<18x16xf32> -> vector<18x16xf32>
    %c14_109 = arith.constant 14 : index
    %c0_110 = arith.constant 0 : index
    %c0_111 = arith.constant 0 : index
    %125 = vector.load %arg4[%c14_109, %c0_110, %c0_111] : memref<16x16x32xf32, #tpu.memory_space<vmem>>, vector<1x16x32xf32>
    %126 = vector.shape_cast %125 : vector<1x16x32xf32> to vector<16x32xf32>
    %cst_112 = arith.constant dense<0.000000e+00> : vector<18x32xf32>
    %127 = tpu.matmul %124, %126, %cst_112 {dimension_numbers = #tpu.dot_dimension_numbers<[1], [0], [0], [1], [0, 0, 1, 1], [], []>} : vector<18x16xf32>, vector<16x32xf32>, vector<18x32xf32> -> vector<18x32xf32>
    %128 = arith.addf %120, %127 : vector<18x32xf32>
    %c15 = arith.constant 15 : index
    %c0_113 = arith.constant 0 : index
    %c0_114 = arith.constant 0 : index
    %129 = vector.load %arg3[%c15, %c0_113, %c0_114] : memref<16x18x128xbf16, #tpu.memory_space<vmem>>, vector<1x18x128xbf16>
    %130 = vector.shape_cast %129 : vector<1x18x128xbf16> to vector<18x128xbf16>
    %131 = arith.extf %130 : vector<18x128xbf16> to vector<18x128xf32>
    %cst_115 = arith.constant dense<0.000000e+00> : vector<18x16xf32>
    %132 = tpu.matmul %131, %7, %cst_115 {dimension_numbers = #tpu.dot_dimension_numbers<[1], [0], [0], [1], [0, 0, 1, 1], [], []>} : vector<18x128xf32>, vector<128x16xf32>, vector<18x16xf32> -> vector<18x16xf32>
    %c15_116 = arith.constant 15 : index
    %c0_117 = arith.constant 0 : index
    %c0_118 = arith.constant 0 : index
    %133 = vector.load %arg4[%c15_116, %c0_117, %c0_118] : memref<16x16x32xf32, #tpu.memory_space<vmem>>, vector<1x16x32xf32>
    %134 = vector.shape_cast %133 : vector<1x16x32xf32> to vector<16x32xf32>
    %cst_119 = arith.constant dense<0.000000e+00> : vector<18x32xf32>
    %135 = tpu.matmul %132, %134, %cst_119 {dimension_numbers = #tpu.dot_dimension_numbers<[1], [0], [0], [1], [0, 0, 1, 1], [], []>} : vector<18x16xf32>, vector<16x32xf32>, vector<18x32xf32> -> vector<18x32xf32>
    %136 = arith.addf %128, %135 : vector<18x32xf32>
    %c0_120 = arith.constant 0 : index
    %c0_121 = arith.constant 0 : index
    %137 = vector.load %arg5[%c0_120, %c0_121] : memref<1x32xf32, #tpu.memory_space<vmem>>, vector<1x32xf32>
    %138 = vector.broadcast %137 : vector<1x32xf32> to vector<18x32xf32>
    %139 = arith.addf %136, %138 : vector<18x32xf32>
    %cst_122 = arith.constant 0.000000e+00 : f32
    %140 = vector.broadcast %cst_122 : f32 to vector<18x32xf32>
    %141 = arith.maximumf %139, %140 : vector<18x32xf32>
    %c0_123 = arith.constant 0 : index
    %c0_124 = arith.constant 0 : index
    %142 = vector.load %arg6[%c0_123, %c0_124] : memref<18x32xf32, #tpu.memory_space<vmem>>, vector<18x32xf32>
    tpu.vector_store %arg6[%c0_123, %c0_124], %141 {strides = array<i32>} : memref<18x32xf32, #tpu.memory_space<vmem>>, vector<18x32xf32>,
    return
  }
}

</mosaic_0001>

<llo_original>
// kernel: cnn_forward.1
$region0: #{cnn_forward.1}
  #allocation0 [shape = 'u32[]', space=smem, size = 0x4, offset = 0x4, fixed_abs, tag = 'smem constant byte address 0x4 - core index']
  #allocation1 [shape = 'u32[72,128]{1,0:T(1,128)}', space=vmem, size = 0x9000, scoped, tag = 'internal scratch']
  %s0 = inlined_call_operand.vmem [shape: f32[128,192], index: 0, kind: input, shape index: {}]
  %s1 = inlined_call_operand.vmem [shape: f32[192,16], index: 1, kind: input, shape index: {}]
  %s2 = inlined_call_operand.vmem [shape: f32[1,16], index: 2, kind: input, shape index: {}]
  %s3 = inlined_call_operand.vmem [shape: bf16[16,18,128], index: 3, kind: input, shape index: {}]
  %s4 = inlined_call_operand.vmem [shape: f32[16,16,32], index: 4, kind: input, shape index: {}]
  %s5 = inlined_call_operand.vmem [shape: f32[1,32], index: 5, kind: input, shape index: {}]
  %s6 = inlined_call_operand.vmem [shape: f32[18,32], index: 6, kind: output, shape index: {}]
  %s7 = sld [smem:[#allocation0]]
  $region34: #{cnn_forward.1} parent=0
    _
  %s9 = ssub.s32 1, %s7
  %s10 = scalar_select 0, %s9, %s7
  // Predicated region
  $region2: #{cnn_forward.1} parent=0 // pred_check
    _
  $region3: #{cnn_forward.1} parent=0 // pred_check_branch
    %12 = sbr.rel (0) target = $region5
  $region4: #{cnn_forward.1} parent=0 // pred_region
    _
  $region5: #{cnn_forward.1} parent=0 // pred_fallthru
    _
  // Predicated region
  $region6: #{cnn_forward.1} parent=0 // pred_check
    _
  $region7: #{cnn_forward.1} parent=0 // pred_check_branch
    %14 = sbr.rel (0) target = $region9
  $region8: #{cnn_forward.1} parent=0 // pred_region
    _
  $region9: #{cnn_forward.1} parent=0 // pred_fallthru
    _
  // Predicated region
  $region10: #{cnn_forward.1} parent=0 // pred_check
    _
  $region11: #{cnn_forward.1} parent=0 // pred_check_branch
    %16 = sbr.rel (0) target = $region13
  $region12: #{cnn_forward.1} parent=0 // pred_region
    _
  $region13: #{cnn_forward.1} parent=0 // pred_fallthru
    _
  // Predicated region
  $region14: #{cnn_forward.1} parent=0 // pred_check
    _
  $region15: #{cnn_forward.1} parent=0 // pred_check_branch
    %18 = sbr.rel (0) target = $region17
  $region16: #{cnn_forward.1} parent=0 // pred_region
    _
  $region17: #{cnn_forward.1} parent=0 // pred_fallthru
    _
  // Predicated region
  $region18: #{cnn_forward.1} parent=0 // pred_check
    _
  $region19: #{cnn_forward.1} parent=0 // pred_check_branch
    %20 = sbr.rel (0) target = $region21
  $region20: #{cnn_forward.1} parent=0 // pred_region
    _
  $region21: #{cnn_forward.1} parent=0 // pred_fallthru
    _
  // Predicated region
  $region22: #{cnn_forward.1} parent=0 // pred_check
    _
  $region23: #{cnn_forward.1} parent=0 // pred_check_branch
    %22 = sbr.rel (0) target = $region25
  $region24: #{cnn_forward.1} parent=0 // pred_region
    _
  $region25: #{cnn_forward.1} parent=0 // pred_fallthru
    _
  %v23 = vld [vmem:[%s0] sm:$0xff]
  %v24 = vld [vmem:[%s0 + $0x8] sm:$0xff]
  %v25 = vld [vmem:[%s0 + $0x10] sm:$0xff]
  %v26 = vld [vmem:[%s0 + $0x18] sm:$0xff]
  %v27 = vld [vmem:[%s0 + $0x20] sm:$0xff]
  %v28 = vld [vmem:[%s0 + $0x28] sm:$0xff]
  %v29 = vld [vmem:[%s0 + $0x30] sm:$0xff]
  %v30 = vld [vmem:[%s0 + $0x38] sm:$0xff]
  %v31 = vld [vmem:[%s0 + $0x40] sm:$0xff]
  %v32 = vld [vmem:[%s0 + $0x48] sm:$0xff]
  %v33 = vld [vmem:[%s0 + $0x50] sm:$0xff]
  %v34 = vld [vmem:[%s0 + $0x58] sm:$0xff]
  %v35 = vld [vmem:[%s0 + $0x60] sm:$0xff]
  %v36 = vld [vmem:[%s0 + $0x68] sm:$0xff]
  %v37 = vld [vmem:[%s0 + $0x70] sm:$0xff]
  %v38 = vld [vmem:[%s0 + $0x78] sm:$0xff]
  %v39 = vld [vmem:[%s0 + $0x80] sm:$0xff]
  %v40 = vld [vmem:[%s0 + $0x88] sm:$0xff]
  %v41 = vld [vmem:[%s0 + $0x90] sm:$0xff]
  %v42 = vld [vmem:[%s0 + $0x98] sm:$0xff]
  %v43 = vld [vmem:[%s0 + $0xa0] sm:$0xff]
  %v44 = vld [vmem:[%s0 + $0xa8] sm:$0xff]
  %v45 = vld [vmem:[%s0 + $0xb0] sm:$0xff]
  %v46 = vld [vmem:[%s0 + $0xb8] sm:$0xff]
  %v47 = vld [vmem:[%s0 + $0xc0] sm:$0xff]
  %v48 = vld [vmem:[%s0 + $0xc8] sm:$0xff]
  %v49 = vld [vmem:[%s0 + $0xd0] sm:$0xff]
  %v50 = vld [vmem:[%s0 + $0xd8] sm:$0xff]
  %v51 = vld [vmem:[%s0 + $0xe0] sm:$0xff]
  %v52 = vld [vmem:[%s0 + $0xe8] sm:$0xff]
  %v53 = vld [vmem:[%s0 + $0xf0] sm:$0xff]
  %v54 = vld [vmem:[%s0 + $0xf8] sm:$0xff]
  %v55 = vld [vmem:[%s1] sm:$0xff]
  %v56 = vld [vmem:[%s1 + $0x8] sm:$0xff]
  %v57 = vld [vmem:[%s1 + $0x10] sm:$0xff]
  %v58 = vld [vmem:[%s1 + $0x18] sm:$0xff]
  %v59 = vld [vmem:[%s1 + $0x20] sm:$0xff]
  %v60 = vld [vmem:[%s1 + $0x28] sm:$0xff]
  %v61 = vld [vmem:[%s1 + $0x30] sm:$0xff]
  %v62 = vld [vmem:[%s1 + $0x38] sm:$0xff]
  %v63 = vld [vmem:[%s1 + $0x40] sm:$0xff]
  %v64 = vld [vmem:[%s1 + $0x48] sm:$0xff]
  %v65 = vld [vmem:[%s1 + $0x50] sm:$0xff]
  %v66 = vld [vmem:[%s1 + $0x58] sm:$0xff]
  %v67 = vld [vmem:[%s1 + $0x60] sm:$0xff]
  %v68 = vld [vmem:[%s1 + $0x68] sm:$0xff]
  %v69 = vld [vmem:[%s1 + $0x70] sm:$0xff]
  %v70 = vld [vmem:[%s1 + $0x78] sm:$0xff]
  %v71 = vld [vmem:[%s1 + $0x80] sm:$0xff]
  %v72 = vld [vmem:[%s1 + $0x88] sm:$0xff]
  %v73 = vld [vmem:[%s1 + $0x90] sm:$0xff]
  %v74 = vld [vmem:[%s1 + $0x98] sm:$0xff]
  %v75 = vld [vmem:[%s1 + $0xa0] sm:$0xff]
  %v76 = vld [vmem:[%s1 + $0xa8] sm:$0xff]
  %v77 = vld [vmem:[%s1 + $0xb0] sm:$0xff]
  %v78 = vld [vmem:[%s1 + $0xb8] sm:$0xff]
  %v79 = vld [vmem:[%s2] sm:$0x1]
  %v81 = vperm.slane %v79, 0
  %vm83 = vcmask 523264
  %v85 = vsel %vm83, %v24, 0
  %v88 = vsel %vm83, %v26, 0
  %v91 = vsel %vm83, %v28, 0
  %v94 = vsel %vm83, %v30, 0
  %v97 = vsel %vm83, %v32, 0
  %v100 = vsel %vm83, %v34, 0
  %v103 = vsel %vm83, %v36, 0
  %v106 = vsel %vm83, %v38, 0
  %v109 = vsel %vm83, %v40, 0
  %v112 = vsel %vm83, %v42, 0
  %v115 = vsel %vm83, %v44, 0
  %v118 = vsel %vm83, %v46, 0
  %v121 = vsel %vm83, %v48, 0
  %v124 = vsel %vm83, %v50, 0
  %v127 = vsel %vm83, %v52, 0
  %v130 = vsel %vm83, %v54, 0
  %132 = vmatpush.msra.mxu0 %v70
  %133 = vmatpush.msra.mxu0 %v69
  %134 = vmatpush.msra.mxu0 %v68
  %135 = vmatpush.msra.mxu0 %v67
  %136 = vmatpush.msra.mxu0 %v66
  %137 = vmatpush.msra.mxu0 %v65
  %138 = vmatpush.msra.mxu0 %v64
  %139 = vmatpush.msra.mxu0 %v63
  %140 = vmatpush.msra.mxu0 %v62
  %141 = vmatpush.msra.mxu0 %v61
  %142 = vmatpush.msra.mxu0 %v60
  %143 = vmatpush.msra.mxu0 %v59
  %144 = vmatpush.msra.mxu0 %v58
  %145 = vmatpush.msra.mxu0 %v57
  %146 = vmatpush.msra.mxu0 %v56
  %147 = vmatpush.msra.mxu0 %v55
  %148 = vmatmul.f32.gmra.mxu0 %v23
  %v149 = vpop.f32.mrf.mxu0
  %v150 = vadd.f32 %v81, %v149
  %151 = vmatmul.f32.gmra.mxu0 %v25
  %v152 = vpop.f32.mrf.mxu0
  %v153 = vadd.f32 %v81, %v152
  %154 = vmatmul.f32.gmra.mxu0 %v27
  %v155 = vpop.f32.mrf.mxu0
  %v156 = vadd.f32 %v81, %v155
  %157 = vmatmul.f32.gmra.mxu0 %v29
  %v158 = vpop.f32.mrf.mxu0
  %v159 = vadd.f32 %v81, %v158
  %160 = vmatmul.f32.gmra.mxu0 %v31
  %v161 = vpop.f32.mrf.mxu0
  %v162 = vadd.f32 %v81, %v161
  %163 = vmatmul.f32.gmra.mxu0 %v33
  %v164 = vpop.f32.mrf.mxu0
  %v165 = vadd.f32 %v81, %v164
  %166 = vmatmul.f32.gmra.mxu0 %v35
  %v167 = vpop.f32.mrf.mxu0
  %v168 = vadd.f32 %v81, %v167
  %169 = vmatmul.f32.gmra.mxu0 %v37
  %v170 = vpop.f32.mrf.mxu0
  %v171 = vadd.f32 %v81, %v170
  %172 = vmatmul.f32.gmra.mxu0 %v39
  %v173 = vpop.f32.mrf.mxu0
  %v174 = vadd.f32 %v81, %v173
  %175 = vmatmul.f32.gmra.mxu0 %v41
  %v176 = vpop.f32.mrf.mxu0
  %v177 = vadd.f32 %v81, %v176
  %178 = vmatmul.f32.gmra.mxu0 %v43
  %v179 = vpop.f32.mrf.mxu0
  %v180 = vadd.f32 %v81, %v179
  %181 = vmatmul.f32.gmra.mxu0 %v45
  %v182 = vpop.f32.mrf.mxu0
  %v183 = vadd.f32 %v81, %v182
  %184 = vmatmul.f32.gmra.mxu0 %v47
  %v185 = vpop.f32.mrf.mxu0
  %v186 = vadd.f32 %v81, %v185
  %187 = vmatmul.f32.gmra.mxu0 %v49
  %v188 = vpop.f32.mrf.mxu0
  %v189 = vadd.f32 %v81, %v188
  %190 = vmatmul.f32.gmra.mxu0 %v51
  %v191 = vpop.f32.mrf.mxu0
  %v192 = vadd.f32 %v81, %v191
  %193 = vmatmul.f32.gmra.mxu0 %v53
  %v194 = vpop.f32.mrf.mxu0
  %v195 = vadd.f32 %v81, %v194
  %196 = vdwg.mxu0
  %197 = vmatpush.msra.mxu0 0.0
  %198 = vmatpush.msra.mxu0 0.0
  %199 = vmatpush.msra.mxu0 0.0
  %200 = vmatpush.msra.mxu0 0.0
  %201 = vmatpush.msra.mxu0 0.0
  %202 = vmatpush.msra.mxu0 0.0
  %203 = vmatpush.msra.mxu0 0.0
  %204 = vmatpush.msra.mxu0 0.0
  %205 = vmatpush.msra.mxu0 %v78
  %206 = vmatpush.msra.mxu0 %v77
  %207 = vmatpush.msra.mxu0 %v76
  %208 = vmatpush.msra.mxu0 %v75
  %209 = vmatpush.msra.mxu0 %v74
  %210 = vmatpush.msra.mxu0 %v73
  %211 = vmatpush.msra.mxu0 %v72
  %212 = vmatpush.msra.mxu0 %v71
  %213 = vmatmul.f32.gmra.mxu0 %v85
  %v214 = vpop.f32.mrf.mxu0
  %v215 = vadd.f32 %v150, %v214
  %216 = vmatmul.f32.gmra.mxu0 %v88
  %v217 = vpop.f32.mrf.mxu0
  %v218 = vadd.f32 %v153, %v217
  %219 = vmatmul.f32.gmra.mxu0 %v91
  %v220 = vpop.f32.mrf.mxu0
  %v221 = vadd.f32 %v156, %v220
  %222 = vmatmul.f32.gmra.mxu0 %v94
  %v223 = vpop.f32.mrf.mxu0
  %v224 = vadd.f32 %v159, %v223
  %225 = vmatmul.f32.gmra.mxu0 %v97
  %v226 = vpop.f32.mrf.mxu0
  %v227 = vadd.f32 %v162, %v226
  %228 = vmatmul.f32.gmra.mxu0 %v100
  %v229 = vpop.f32.mrf.mxu0
  %v230 = vadd.f32 %v165, %v229
  %231 = vmatmul.f32.gmra.mxu0 %v103
  %v232 = vpop.f32.mrf.mxu0
  %v233 = vadd.f32 %v168, %v232
  %234 = vmatmul.f32.gmra.mxu0 %v106
  %v235 = vpop.f32.mrf.mxu0
  %v236 = vadd.f32 %v171, %v235
  %237 = vmatmul.f32.gmra.mxu0 %v109
  %v238 = vpop.f32.mrf.mxu0
  %v239 = vadd.f32 %v174, %v238
  %240 = vmatmul.f32.gmra.mxu0 %v112
  %v241 = vpop.f32.mrf.mxu0
  %v242 = vadd.f32 %v177, %v241
  %243 = vmatmul.f32.gmra.mxu0 %v115
  %v244 = vpop.f32.mrf.mxu0
  %v245 = vadd.f32 %v180, %v244
  %246 = vmatmul.f32.gmra.mxu0 %v118
  %v247 = vpop.f32.mrf.mxu0
  %v248 = vadd.f32 %v183, %v247
  %249 = vmatmul.f32.gmra.mxu0 %v121
  %v250 = vpop.f32.mrf.mxu0
  %v251 = vadd.f32 %v186, %v250
  %252 = vmatmul.f32.gmra.mxu0 %v124
  %v253 = vpop.f32.mrf.mxu0
  %v254 = vadd.f32 %v189, %v253
  %255 = vmatmul.f32.gmra.mxu0 %v127
  %v256 = vpop.f32.mrf.mxu0
  %v257 = vadd.f32 %v192, %v256
  %258 = vmatmul.f32.gmra.mxu0 %v130
  %v259 = vpop.f32.mrf.mxu0
  %v260 = vadd.f32 %v195, %v259
  %261 = vdwg.mxu0
  %v262 = vmax.f32 %v215, 0.0
  %v263 = vmax.f32 %v218, 0.0
  %v264 = vmax.f32 %v221, 0.0
  %v265 = vmax.f32 %v224, 0.0
  %v266 = vmax.f32 %v227, 0.0
  %v267 = vmax.f32 %v230, 0.0
  %v268 = vmax.f32 %v233, 0.0
  %v269 = vmax.f32 %v236, 0.0
  %v270 = vmax.f32 %v239, 0.0
  %v271 = vmax.f32 %v242, 0.0
  %v272 = vmax.f32 %v245, 0.0
  %v273 = vmax.f32 %v248, 0.0
  %v274 = vmax.f32 %v251, 0.0
  %v275 = vmax.f32 %v254, 0.0
  %v276 = vmax.f32 %v257, 0.0
  %v277 = vmax.f32 %v260, 0.0
  %v278 = vld [vmem:[%s3] sm:$0xf]
  %v279 = vld [vmem:[%s3 + $0x4] sm:$0xf]
  %v280 = vld [vmem:[%s3 + $0x8] sm:$0x1]
  %v281 = vunpack.c.l.bf16 %v278
  %v282 = vunpack.c.l.bf16 %v279
  %v283 = vunpack.c.l.bf16 %v280
  %284 = vmatpush.msra.mxu0 %v277
  %285 = vmatpush.msra.mxu0 %v276
  %286 = vmatpush.msra.mxu0 %v275
  %287 = vmatpush.msra.mxu0 %v274
  %288 = vmatpush.msra.mxu0 %v273
  %289 = vmatpush.msra.mxu0 %v272
  %290 = vmatpush.msra.mxu0 %v271
  %291 = vmatpush.msra.mxu0 %v270
  %292 = vmatpush.msra.mxu0 %v269
  %293 = vmatpush.msra.mxu0 %v268
  %294 = vmatpush.msra.mxu0 %v267
  %295 = vmatpush.msra.mxu0 %v266
  %296 = vmatpush.msra.mxu0 %v265
  %297 = vmatpush.msra.mxu0 %v264
  %298 = vmatpush.msra.mxu0 %v263
  %299 = vmatpush.msra.mxu0 %v262
  %300 = vmatmul.f32.gmra.mxu0 %v281
  %v301 = vpop.f32.mrf.mxu0
  %v302 = vadd.f32 0.0, %v301
  %303 = vmatmul.f32.gmra.mxu0 %v282
  %v304 = vpop.f32.mrf.mxu0
  %v305 = vadd.f32 0.0, %v304
  %306 = vmatmul.f32.gmra.mxu0 %v283
  %v307 = vpop.f32.mrf.mxu0
  %v308 = vadd.f32 0.0, %v307
  %309 = vdwg.mxu0
  %v310 = vld [vmem:[%s4] sm:$0xff]
  %v311 = vld [vmem:[%s4 + $0x8] sm:$0xff]
  %s312 = scalar_lea.vmem %s3, 12
  %v313 = vld [vmem:[%s312] sm:$0xf]
  %v314 = vld [vmem:[%s312 + $0x4] sm:$0xf]
  %v315 = vld [vmem:[%s312 + $0x8] sm:$0x1]
  %v316 = vunpack.c.l.bf16 %v313
  %v317 = vunpack.c.l.bf16 %v314
  %v318 = vunpack.c.l.bf16 %v315
  %319 = vmatpush.msra.mxu0 %v277
  %320 = vmatpush.msra.mxu0 %v276
  %321 = vmatpush.msra.mxu0 %v275
  %322 = vmatpush.msra.mxu0 %v274
  %323 = vmatpush.msra.mxu0 %v273
  %324 = vmatpush.msra.mxu0 %v272
  %325 = vmatpush.msra.mxu0 %v271
  %326 = vmatpush.msra.mxu0 %v270
  %327 = vmatpush.msra.mxu0 %v269
  %328 = vmatpush.msra.mxu0 %v268
  %329 = vmatpush.msra.mxu0 %v267
  %330 = vmatpush.msra.mxu0 %v266
  %331 = vmatpush.msra.mxu0 %v265
  %332 = vmatpush.msra.mxu0 %v264
  %333 = vmatpush.msra.mxu0 %v263
  %334 = vmatpush.msra.mxu0 %v262
  %335 = vmatmul.f32.gmra.mxu0 %v316
  %v336 = vpop.f32.mrf.mxu0
  %v337 = vadd.f32 0.0, %v336
  %338 = vmatmul.f32.gmra.mxu0 %v317
  %v339 = vpop.f32.mrf.mxu0
  %v340 = vadd.f32 0.0, %v339
  %341 = vmatmul.f32.gmra.mxu0 %v318
  %v342 = vpop.f32.mrf.mxu0
  %v343 = vadd.f32 0.0, %v342
  %344 = vdwg.mxu0
  %s345 = scalar_lea.vmem %s4, 16
  %v346 = vld [vmem:[%s345] sm:$0xff]
  %v347 = vld [vmem:[%s345 + $0x8] sm:$0xff]
  %vm348 = vcmask 130048
  %v350 = vsel %vm348, %v337, 0
  %v353 = vsel %vm348, %v340, 0
  %v356 = vsel %vm348, %v343, 0
  %358 = vmatpush.msra.mxu0 0.0
  %359 = vmatpush.msra.mxu0 0.0
  %360 = vmatpush.msra.mxu0 0.0
  %361 = vmatpush.msra.mxu0 0.0
  %362 = vmatpush.msra.mxu0 0.0
  %363 = vmatpush.msra.mxu0 0.0
  %364 = vmatpush.msra.mxu0 0.0
  %365 = vmatpush.msra.mxu0 0.0
  %366 = vmatpush.msra.mxu0 0.0
  %367 = vmatpush.msra.mxu0 0.0
  %368 = vmatpush.msra.mxu0 0.0
  %369 = vmatpush.msra.mxu0 0.0
  %370 = vmatpush.msra.mxu0 0.0
  %371 = vmatpush.msra.mxu0 0.0
  %372 = vmatpush.msra.mxu0 %v347
  %373 = vmatpush.msra.mxu0 %v346
  %374 = vmatmul.f32.gmra.mxu0 %v350
  %v375 = vpop.f32.mrf.mxu0
  %v376 = vadd.f32 0.0, %v375
  %377 = vmatmul.f32.gmra.mxu0 %v353
  %v378 = vpop.f32.mrf.mxu0
  %v379 = vadd.f32 0.0, %v378
  %380 = vmatmul.f32.gmra.mxu0 %v356
  %v381 = vpop.f32.mrf.mxu0
  %v382 = vadd.f32 0.0, %v381
  %383 = vdwg.mxu0
  %v385 = vsel %vm348, %v302, 0
  %v388 = vsel %vm348, %v305, 0
  %v391 = vsel %vm348, %v308, 0
  %393 = vmatpush.msra.mxu0 0.0
  %394 = vmatpush.msra.mxu0 0.0
  %395 = vmatpush.msra.mxu0 0.0
  %396 = vmatpush.msra.mxu0 0.0
  %397 = vmatpush.msra.mxu0 0.0
  %398 = vmatpush.msra.mxu0 0.0
  %399 = vmatpush.msra.mxu0 0.0
  %400 = vmatpush.msra.mxu0 0.0
  %401 = vmatpush.msra.mxu0 0.0
  %402 = vmatpush.msra.mxu0 0.0
  %403 = vmatpush.msra.mxu0 0.0
  %404 = vmatpush.msra.mxu0 0.0
  %405 = vmatpush.msra.mxu0 0.0
  %406 = vmatpush.msra.mxu0 0.0
  %407 = vmatpush.msra.mxu0 %v311
  %408 = vmatpush.msra.mxu0 %v310
  %409 = vmatmul.f32.gmra.mxu0 %v385
  %v410 = vpop.f32.mrf.mxu0
  %v411 = vadd.f32 %v376, %v410
  %412 = vmatmul.f32.gmra.mxu0 %v388
  %v413 = vpop.f32.mrf.mxu0
  %v414 = vadd.f32 %v379, %v413
  %415 = vmatmul.f32.gmra.mxu0 %v391
  %v416 = vpop.f32.mrf.mxu0
  %v417 = vadd.f32 %v382, %v416
  %418 = vdwg.mxu0
  %s419 = scalar_lea.vmem %s3, 24
  %v420 = vld [vmem:[%s419] sm:$0xf]
  %v421 = vld [vmem:[%s419 + $0x4] sm:$0xf]
  %v422 = vld [vmem:[%s419 + $0x8] sm:$0x1]
  %v423 = vunpack.c.l.bf16 %v420
  %v424 = vunpack.c.l.bf16 %v421
  %v425 = vunpack.c.l.bf16 %v422
  %426 = vmatpush.msra.mxu0 %v277
  %427 = vmatpush.msra.mxu0 %v276
  %428 = vmatpush.msra.mxu0 %v275
  %429 = vmatpush.msra.mxu0 %v274
  %430 = vmatpush.msra.mxu0 %v273
  %431 = vmatpush.msra.mxu0 %v272
  %432 = vmatpush.msra.mxu0 %v271
  %433 = vmatpush.msra.mxu0 %v270
  %434 = vmatpush.msra.mxu0 %v269
  %435 = vmatpush.msra.mxu0 %v268
  %436 = vmatpush.msra.mxu0 %v267
  %437 = vmatpush.msra.mxu0 %v266
  %438 = vmatpush.msra.mxu0 %v265
  %439 = vmatpush.msra.mxu0 %v264
  %440 = vmatpush.msra.mxu0 %v263
  %441 = vmatpush.msra.mxu0 %v262
  %442 = vmatmul.f32.gmra.mxu0 %v423
  %v443 = vpop.f32.mrf.mxu0
  %v444 = vadd.f32 0.0, %v443
  %445 = vmatmul.f32.gmra.mxu0 %v424
  %v446 = vpop.f32.mrf.mxu0
  %v447 = vadd.f32 0.0, %v446
  %448 = vmatmul.f32.gmra.mxu0 %v425
  %v449 = vpop.f32.mrf.mxu0
  %v450 = vadd.f32 0.0, %v449
  %451 = vdwg.mxu0
  %s452 = scalar_lea.vmem %s4, 32
  %v453 = vld [vmem:[%s452] sm:$0xff]
  %v454 = vld [vmem:[%s452 + $0x8] sm:$0xff]
  %v456 = vsel %vm348, %v444, 0
  %v459 = vsel %vm348, %v447, 0
  %v462 = vsel %vm348, %v450, 0
  %464 = vmatpush.msra.mxu0 0.0
  %465 = vmatpush.msra.mxu0 0.0
  %466 = vmatpush.msra.mxu0 0.0
  %467 = vmatpush.msra.mxu0 0.0
  %468 = vmatpush.msra.mxu0 0.0
  %469 = vmatpush.msra.mxu0 0.0
  %470 = vmatpush.msra.mxu0 0.0
  %471 = vmatpush.msra.mxu0 0.0
  %472 = vmatpush.msra.mxu0 0.0
  %473 = vmatpush.msra.mxu0 0.0
  %474 = vmatpush.msra.mxu0 0.0
  %475 = vmatpush.msra.mxu0 0.0
  %476 = vmatpush.msra.mxu0 0.0
  %477 = vmatpush.msra.mxu0 0.0
  %478 = vmatpush.msra.mxu0 %v454
  %479 = vmatpush.msra.mxu0 %v453
  %480 = vmatmul.f32.gmra.mxu0 %v456
  %v481 = vpop.f32.mrf.mxu0
  %v482 = vadd.f32 0.0, %v481
  %483 = vmatmul.f32.gmra.mxu0 %v459
  %v484 = vpop.f32.mrf.mxu0
  %v485 = vadd.f32 0.0, %v484
  %486 = vmatmul.f32.gmra.mxu0 %v462
  %v487 = vpop.f32.mrf.mxu0
  %v488 = vadd.f32 0.0, %v487
  %489 = vdwg.mxu0
  %v490 = vadd.f32 %v411, %v482
  %v491 = vadd.f32 %v414, %v485
  %v492 = vadd.f32 %v417, %v488
  %s493 = scalar_lea.vmem %s3, 36
  %v494 = vld [vmem:[%s493] sm:$0xf]
  %v495 = vld [vmem:[%s493 + $0x4] sm:$0xf]
  %v496 = vld [vmem:[%s493 + $0x8] sm:$0x1]
  %v497 = vunpack.c.l.bf16 %v494
  %v498 = vunpack.c.l.bf16 %v495
  %v499 = vunpack.c.l.bf16 %v496
  %500 = vmatpush.msra.mxu0 %v277
  %501 = vmatpush.msra.mxu0 %v276
  %502 = vmatpush.msra.mxu0 %v275
  %503 = vmatpush.msra.mxu0 %v274
  %504 = vmatpush.msra.mxu0 %v273
  %505 = vmatpush.msra.mxu0 %v272
  %506 = vmatpush.msra.mxu0 %v271
  %507 = vmatpush.msra.mxu0 %v270
  %508 = vmatpush.msra.mxu0 %v269
  %509 = vmatpush.msra.mxu0 %v268
  %510 = vmatpush.msra.mxu0 %v267
  %511 = vmatpush.msra.mxu0 %v266
  %512 = vmatpush.msra.mxu0 %v265
  %513 = vmatpush.msra.mxu0 %v264
  %514 = vmatpush.msra.mxu0 %v263
  %515 = vmatpush.msra.mxu0 %v262
  %516 = vmatmul.f32.gmra.mxu0 %v497
  %v517 = vpop.f32.mrf.mxu0
  %v518 = vadd.f32 0.0, %v517
  %519 = vmatmul.f32.gmra.mxu0 %v498
  %v520 = vpop.f32.mrf.mxu0
  %v521 = vadd.f32 0.0, %v520
  %522 = vmatmul.f32.gmra.mxu0 %v499
  %v523 = vpop.f32.mrf.mxu0
  %v524 = vadd.f32 0.0, %v523
  %525 = vdwg.mxu0
  %s526 = scalar_lea.vmem %s4, 48
  %v527 = vld [vmem:[%s526] sm:$0xff]
  %v528 = vld [vmem:[%s526 + $0x8] sm:$0xff]
  %v530 = vsel %vm348, %v518, 0
  %v533 = vsel %vm348, %v521, 0
  %v536 = vsel %vm348, %v524, 0
  %538 = vmatpush.msra.mxu0 0.0
  %539 = vmatpush.msra.mxu0 0.0
  %540 = vmatpush.msra.mxu0 0.0
  %541 = vmatpush.msra.mxu0 0.0
  %542 = vmatpush.msra.mxu0 0.0
  %543 = vmatpush.msra.mxu0 0.0
  %544 = vmatpush.msra.mxu0 0.0
  %545 = vmatpush.msra.mxu0 0.0
  %546 = vmatpush.msra.mxu0 0.0
  %547 = vmatpush.msra.mxu0 0.0
  %548 = vmatpush.msra.mxu0 0.0
  %549 = vmatpush.msra.mxu0 0.0
  %550 = vmatpush.msra.mxu0 0.0
  %551 = vmatpush.msra.mxu0 0.0
  %552 = vmatpush.msra.mxu0 %v528
  %553 = vmatpush.msra.mxu0 %v527
  %554 = vmatmul.f32.gmra.mxu0 %v530
  %v555 = vpop.f32.mrf.mxu0
  %v556 = vadd.f32 0.0, %v555
  %557 = vmatmul.f32.gmra.mxu0 %v533
  %v558 = vpop.f32.mrf.mxu0
  %v559 = vadd.f32 0.0, %v558
  %560 = vmatmul.f32.gmra.mxu0 %v536
  %v561 = vpop.f32.mrf.mxu0
  %v562 = vadd.f32 0.0, %v561
  %563 = vdwg.mxu0
  %v564 = vadd.f32 %v490, %v556
  %v565 = vadd.f32 %v491, %v559
  %v566 = vadd.f32 %v492, %v562
  %s567 = scalar_lea.vmem %s3, 48
  %v568 = vld [vmem:[%s567] sm:$0xf]
  %v569 = vld [vmem:[%s567 + $0x4] sm:$0xf]
  %v570 = vld [vmem:[%s567 + $0x8] sm:$0x1]
  %v571 = vunpack.c.l.bf16 %v568
  %v572 = vunpack.c.l.bf16 %v569
  %v573 = vunpack.c.l.bf16 %v570
  %574 = vmatpush.msra.mxu0 %v277
  %575 = vmatpush.msra.mxu0 %v276
  %576 = vmatpush.msra.mxu0 %v275
  %577 = vmatpush.msra.mxu0 %v274
  %578 = vmatpush.msra.mxu0 %v273
  %579 = vmatpush.msra.mxu0 %v272
  %580 = vmatpush.msra.mxu0 %v271
  %581 = vmatpush.msra.mxu0 %v270
  %582 = vmatpush.msra.mxu0 %v269
  %583 = vmatpush.msra.mxu0 %v268
  %584 = vmatpush.msra.mxu0 %v267
  %585 = vmatpush.msra.mxu0 %v266
  %586 = vmatpush.msra.mxu0 %v265
  %587 = vmatpush.msra.mxu0 %v264
  %588 = vmatpush.msra.mxu0 %v263
  %589 = vmatpush.msra.mxu0 %v262
  %590 = vmatmul.f32.gmra.mxu0 %v571
  %v591 = vpop.f32.mrf.mxu0
  %v592 = vadd.f32 0.0, %v591
  %593 = vmatmul.f32.gmra.mxu0 %v572
  %v594 = vpop.f32.mrf.mxu0
  %v595 = vadd.f32 0.0, %v594
  %596 = vmatmul.f32.gmra.mxu0 %v573
  %v597 = vpop.f32.mrf.mxu0
  %v598 = vadd.f32 0.0, %v597
  %599 = vdwg.mxu0
  %s600 = scalar_lea.vmem %s4, 64
  %v601 = vld [vmem:[%s600] sm:$0xff]
  %v602 = vld [vmem:[%s600 + $0x8] sm:$0xff]
  %v604 = vsel %vm348, %v592, 0
  %v607 = vsel %vm348, %v595, 0
  %v610 = vsel %vm348, %v598, 0
  %612 = vmatpush.msra.mxu0 0.0
  %613 = vmatpush.msra.mxu0 0.0
  %614 = vmatpush.msra.mxu0 0.0
  %615 = vmatpush.msra.mxu0 0.0
  %616 = vmatpush.msra.mxu0 0.0
  %617 = vmatpush.msra.mxu0 0.0
  %618 = vmatpush.msra.mxu0 0.0
  %619 = vmatpush.msra.mxu0 0.0
  %620 = vmatpush.msra.mxu0 0.0
  %621 = vmatpush.msra.mxu0 0.0
  %622 = vmatpush.msra.mxu0 0.0
  %623 = vmatpush.msra.mxu0 0.0
  %624 = vmatpush.msra.mxu0 0.0
  %625 = vmatpush.msra.mxu0 0.0
  %626 = vmatpush.msra.mxu0 %v602
  %627 = vmatpush.msra.mxu0 %v601
  %628 = vmatmul.f32.gmra.mxu0 %v604
  %v629 = vpop.f32.mrf.mxu0
  %v630 = vadd.f32 0.0, %v629
  %631 = vmatmul.f32.gmra.mxu0 %v607
  %v632 = vpop.f32.mrf.mxu0
  %v633 = vadd.f32 0.0, %v632
  %634 = vmatmul.f32.gmra.mxu0 %v610
  %v635 = vpop.f32.mrf.mxu0
  %v636 = vadd.f32 0.0, %v635
  %637 = vdwg.mxu0
  %v638 = vadd.f32 %v564, %v630
  %v639 = vadd.f32 %v565, %v633
  %v640 = vadd.f32 %v566, %v636
  %s641 = scalar_lea.vmem %s3, 60
  %v642 = vld [vmem:[%s641] sm:$0xf]
  %v643 = vld [vmem:[%s641 + $0x4] sm:$0xf]
  %v644 = vld [vmem:[%s641 + $0x8] sm:$0x1]
  %v645 = vunpack.c.l.bf16 %v642
  %v646 = vunpack.c.l.bf16 %v643
  %v647 = vunpack.c.l.bf16 %v644
  %648 = vmatpush.msra.mxu0 %v277
  %649 = vmatpush.msra.mxu0 %v276
  %650 = vmatpush.msra.mxu0 %v275
  %651 = vmatpush.msra.mxu0 %v274
  %652 = vmatpush.msra.mxu0 %v273
  %653 = vmatpush.msra.mxu0 %v272
  %654 = vmatpush.msra.mxu0 %v271
  %655 = vmatpush.msra.mxu0 %v270
  %656 = vmatpush.msra.mxu0 %v269
  %657 = vmatpush.msra.mxu0 %v268
  %658 = vmatpush.msra.mxu0 %v267
  %659 = vmatpush.msra.mxu0 %v266
  %660 = vmatpush.msra.mxu0 %v265
  %661 = vmatpush.msra.mxu0 %v264
  %662 = vmatpush.msra.mxu0 %v263
  %663 = vmatpush.msra.mxu0 %v262
  %664 = vmatmul.f32.gmra.mxu0 %v645
  %v665 = vpop.f32.mrf.mxu0
  %v666 = vadd.f32 0.0, %v665
  %667 = vmatmul.f32.gmra.mxu0 %v646
  %v668 = vpop.f32.mrf.mxu0
  %v669 = vadd.f32 0.0, %v668
  %670 = vmatmul.f32.gmra.mxu0 %v647
  %v671 = vpop.f32.mrf.mxu0
  %v672 = vadd.f32 0.0, %v671
  %673 = vdwg.mxu0
  %s674 = scalar_lea.vmem %s4, 80
  %v675 = vld [vmem:[%s674] sm:$0xff]
  %v676 = vld [vmem:[%s674 + $0x8] sm:$0xff]
  %v678 = vsel %vm348, %v666, 0
  %v681 = vsel %vm348, %v669, 0
  %v684 = vsel %vm348, %v672, 0
  %686 = vmatpush.msra.mxu0 0.0
  %687 = vmatpush.msra.mxu0 0.0
  %688 = vmatpush.msra.mxu0 0.0
  %689 = vmatpush.msra.mxu0 0.0
  %690 = vmatpush.msra.mxu0 0.0
  %691 = vmatpush.msra.mxu0 0.0
  %692 = vmatpush.msra.mxu0 0.0
  %693 = vmatpush.msra.mxu0 0.0
  %694 = vmatpush.msra.mxu0 0.0
  %695 = vmatpush.msra.mxu0 0.0
  %696 = vmatpush.msra.mxu0 0.0
  %697 = vmatpush.msra.mxu0 0.0
  %698 = vmatpush.msra.mxu0 0.0
  %699 = vmatpush.msra.mxu0 0.0
  %700 = vmatpush.msra.mxu0 %v676
  %701 = vmatpush.msra.mxu0 %v675
  %702 = vmatmul.f32.gmra.mxu0 %v678
  %v703 = vpop.f32.mrf.mxu0
  %v704 = vadd.f32 0.0, %v703
  %705 = vmatmul.f32.gmra.mxu0 %v681
  %v706 = vpop.f32.mrf.mxu0
  %v707 = vadd.f32 0.0, %v706
  %708 = vmatmul.f32.gmra.mxu0 %v684
  %v709 = vpop.f32.mrf.mxu0
  %v710 = vadd.f32 0.0, %v709
  %711 = vdwg.mxu0
  %v712 = vadd.f32 %v638, %v704
  %v713 = vadd.f32 %v639, %v707
  %v714 = vadd.f32 %v640, %v710
  %s715 = scalar_lea.vmem %s3, 72
  %v716 = vld [vmem:[%s715] sm:$0xf]
  %v717 = vld [vmem:[%s715 + $0x4] sm:$0xf]
  %v718 = vld [vmem:[%s715 + $0x8] sm:$0x1]
  %v719 = vunpack.c.l.bf16 %v716
  %v720 = vunpack.c.l.bf16 %v717
  %v721 = vunpack.c.l.bf16 %v718
  %722 = vmatpush.msra.mxu0 %v277
  %723 = vmatpush.msra.mxu0 %v276
  %724 = vmatpush.msra.mxu0 %v275
  %725 = vmatpush.msra.mxu0 %v274
  %726 = vmatpush.msra.mxu0 %v273
  %727 = vmatpush.msra.mxu0 %v272
  %728 = vmatpush.msra.mxu0 %v271
  %729 = vmatpush.msra.mxu0 %v270
  %730 = vmatpush.msra.mxu0 %v269
  %731 = vmatpush.msra.mxu0 %v268
  %732 = vmatpush.msra.mxu0 %v267
  %733 = vmatpush.msra.mxu0 %v266
  %734 = vmatpush.msra.mxu0 %v265
  %735 = vmatpush.msra.mxu0 %v264
  %736 = vmatpush.msra.mxu0 %v263
  %737 = vmatpush.msra.mxu0 %v262
  %738 = vmatmul.f32.gmra.mxu0 %v719
  %v739 = vpop.f32.mrf.mxu0
  %v740 = vadd.f32 0.0, %v739
  %741 = vmatmul.f32.gmra.mxu0 %v720
  %v742 = vpop.f32.mrf.mxu0
  %v743 = vadd.f32 0.0, %v742
  %744 = vmatmul.f32.gmra.mxu0 %v721
  %v745 = vpop.f32.mrf.mxu0
  %v746 = vadd.f32 0.0, %v745
  %747 = vdwg.mxu0
  %s748 = scalar_lea.vmem %s4, 96
  %v749 = vld [vmem:[%s748] sm:$0xff]
  %v750 = vld [vmem:[%s748 + $0x8] sm:$0xff]
  %v752 = vsel %vm348, %v740, 0
  %v755 = vsel %vm348, %v743, 0
  %v758 = vsel %vm348, %v746, 0
  %760 = vmatpush.msra.mxu0 0.0
  %761 = vmatpush.msra.mxu0 0.0
  %762 = vmatpush.msra.mxu0 0.0
  %763 = vmatpush.msra.mxu0 0.0
  %764 = vmatpush.msra.mxu0 0.0
  %765 = vmatpush.msra.mxu0 0.0
  %766 = vmatpush.msra.mxu0 0.0
  %767 = vmatpush.msra.mxu0 0.0
  %768 = vmatpush.msra.mxu0 0.0
  %769 = vmatpush.msra.mxu0 0.0
  %770 = vmatpush.msra.mxu0 0.0
  %771 = vmatpush.msra.mxu0 0.0
  %772 = vmatpush.msra.mxu0 0.0
  %773 = vmatpush.msra.mxu0 0.0
  %774 = vmatpush.msra.mxu0 %v750
  %775 = vmatpush.msra.mxu0 %v749
  %776 = vmatmul.f32.gmra.mxu0 %v752
  %v777 = vpop.f32.mrf.mxu0
  %v778 = vadd.f32 0.0, %v777
  %779 = vmatmul.f32.gmra.mxu0 %v755
  %v780 = vpop.f32.mrf.mxu0
  %v781 = vadd.f32 0.0, %v780
  %782 = vmatmul.f32.gmra.mxu0 %v758
  %v783 = vpop.f32.mrf.mxu0
  %v784 = vadd.f32 0.0, %v783
  %785 = vdwg.mxu0
  %v786 = vadd.f32 %v712, %v778
  %v787 = vadd.f32 %v713, %v781
  %v788 = vadd.f32 %v714, %v784
  %s789 = scalar_lea.vmem %s3, 84
  %v790 = vld [vmem:[%s789] sm:$0xf]
  %v791 = vld [vmem:[%s789 + $0x4] sm:$0xf]
  %v792 = vld [vmem:[%s789 + $0x8] sm:$0x1]
  %v793 = vunpack.c.l.bf16 %v790
  %v794 = vunpack.c.l.bf16 %v791
  %v795 = vunpack.c.l.bf16 %v792
  %796 = vmatpush.msra.mxu0 %v277
  %797 = vmatpush.msra.mxu0 %v276
  %798 = vmatpush.msra.mxu0 %v275
  %799 = vmatpush.msra.mxu0 %v274
  %800 = vmatpush.msra.mxu0 %v273
  %801 = vmatpush.msra.mxu0 %v272
  %802 = vmatpush.msra.mxu0 %v271
  %803 = vmatpush.msra.mxu0 %v270
  %804 = vmatpush.msra.mxu0 %v269
  %805 = vmatpush.msra.mxu0 %v268
  %806 = vmatpush.msra.mxu0 %v267
  %807 = vmatpush.msra.mxu0 %v266
  %808 = vmatpush.msra.mxu0 %v265
  %809 = vmatpush.msra.mxu0 %v264
  %810 = vmatpush.msra.mxu0 %v263
  %811 = vmatpush.msra.mxu0 %v262
  %812 = vmatmul.f32.gmra.mxu0 %v793
  %v813 = vpop.f32.mrf.mxu0
  %v814 = vadd.f32 0.0, %v813
  %815 = vmatmul.f32.gmra.mxu0 %v794
  %v816 = vpop.f32.mrf.mxu0
  %v817 = vadd.f32 0.0, %v816
  %818 = vmatmul.f32.gmra.mxu0 %v795
  %v819 = vpop.f32.mrf.mxu0
  %v820 = vadd.f32 0.0, %v819
  %821 = vdwg.mxu0
  %s822 = scalar_lea.vmem %s4, 112
  %v823 = vld [vmem:[%s822] sm:$0xff]
  %v824 = vld [vmem:[%s822 + $0x8] sm:$0xff]
  %v826 = vsel %vm348, %v814, 0
  %v829 = vsel %vm348, %v817, 0
  %v832 = vsel %vm348, %v820, 0
  %834 = vmatpush.msra.mxu0 0.0
  %835 = vmatpush.msra.mxu0 0.0
  %836 = vmatpush.msra.mxu0 0.0
  %837 = vmatpush.msra.mxu0 0.0
  %838 = vmatpush.msra.mxu0 0.0
  %839 = vmatpush.msra.mxu0 0.0
  %840 = vmatpush.msra.mxu0 0.0
  %841 = vmatpush.msra.mxu0 0.0
  %842 = vmatpush.msra.mxu0 0.0
  %843 = vmatpush.msra.mxu0 0.0
  %844 = vmatpush.msra.mxu0 0.0
  %845 = vmatpush.msra.mxu0 0.0
  %846 = vmatpush.msra.mxu0 0.0
  %847 = vmatpush.msra.mxu0 0.0
  %848 = vmatpush.msra.mxu0 %v824
  %849 = vmatpush.msra.mxu0 %v823
  %850 = vmatmul.f32.gmra.mxu0 %v826
  %v851 = vpop.f32.mrf.mxu0
  %v852 = vadd.f32 0.0, %v851
  %853 = vmatmul.f32.gmra.mxu0 %v829
  %v854 = vpop.f32.mrf.mxu0
  %v855 = vadd.f32 0.0, %v854
  %856 = vmatmul.f32.gmra.mxu0 %v832
  %v857 = vpop.f32.mrf.mxu0
  %v858 = vadd.f32 0.0, %v857
  %859 = vdwg.mxu0
  %v860 = vadd.f32 %v786, %v852
  %v861 = vadd.f32 %v787, %v855
  %v862 = vadd.f32 %v788, %v858
  %s863 = scalar_lea.vmem %s3, 96
  %v864 = vld [vmem:[%s863] sm:$0xf]
  %v865 = vld [vmem:[%s863 + $0x4] sm:$0xf]
  %v866 = vld [vmem:[%s863 + $0x8] sm:$0x1]
  %v867 = vunpack.c.l.bf16 %v864
  %v868 = vunpack.c.l.bf16 %v865
  %v869 = vunpack.c.l.bf16 %v866
  %870 = vmatpush.msra.mxu0 %v277
  %871 = vmatpush.msra.mxu0 %v276
  %872 = vmatpush.msra.mxu0 %v275
  %873 = vmatpush.msra.mxu0 %v274
  %874 = vmatpush.msra.mxu0 %v273
  %875 = vmatpush.msra.mxu0 %v272
  %876 = vmatpush.msra.mxu0 %v271
  %877 = vmatpush.msra.mxu0 %v270
  %878 = vmatpush.msra.mxu0 %v269
  %879 = vmatpush.msra.mxu0 %v268
  %880 = vmatpush.msra.mxu0 %v267
  %881 = vmatpush.msra.mxu0 %v266
  %882 = vmatpush.msra.mxu0 %v265
  %883 = vmatpush.msra.mxu0 %v264
  %884 = vmatpush.msra.mxu0 %v263
  %885 = vmatpush.msra.mxu0 %v262
  %886 = vmatmul.f32.gmra.mxu0 %v867
  %v887 = vpop.f32.mrf.mxu0
  %v888 = vadd.f32 0.0, %v887
  %889 = vmatmul.f32.gmra.mxu0 %v868
  %v890 = vpop.f32.mrf.mxu0
  %v891 = vadd.f32 0.0, %v890
  %892 = vmatmul.f32.gmra.mxu0 %v869
  %v893 = vpop.f32.mrf.mxu0
  %v894 = vadd.f32 0.0, %v893
  %895 = vdwg.mxu0
  %s896 = scalar_lea.vmem %s4, 128
  %v897 = vld [vmem:[%s896] sm:$0xff]
  %v898 = vld [vmem:[%s896 + $0x8] sm:$0xff]
  %v900 = vsel %vm348, %v888, 0
  %v903 = vsel %vm348, %v891, 0
  %v906 = vsel %vm348, %v894, 0
  %908 = vmatpush.msra.mxu0 0.0
  %909 = vmatpush.msra.mxu0 0.0
  %910 = vmatpush.msra.mxu0 0.0
  %911 = vmatpush.msra.mxu0 0.0
  %912 = vmatpush.msra.mxu0 0.0
  %913 = vmatpush.msra.mxu0 0.0
  %914 = vmatpush.msra.mxu0 0.0
  %915 = vmatpush.msra.mxu0 0.0
  %916 = vmatpush.msra.mxu0 0.0
  %917 = vmatpush.msra.mxu0 0.0
  %918 = vmatpush.msra.mxu0 0.0
  %919 = vmatpush.msra.mxu0 0.0
  %920 = vmatpush.msra.mxu0 0.0
  %921 = vmatpush.msra.mxu0 0.0
  %922 = vmatpush.msra.mxu0 %v898
  %923 = vmatpush.msra.mxu0 %v897
  %924 = vmatmul.f32.gmra.mxu0 %v900
  %v925 = vpop.f32.mrf.mxu0
  %v926 = vadd.f32 0.0, %v925
  %927 = vmatmul.f32.gmra.mxu0 %v903
  %v928 = vpop.f32.mrf.mxu0
  %v929 = vadd.f32 0.0, %v928
  %930 = vmatmul.f32.gmra.mxu0 %v906
  %v931 = vpop.f32.mrf.mxu0
  %v932 = vadd.f32 0.0, %v931
  %933 = vdwg.mxu0
  %v934 = vadd.f32 %v860, %v926
  %v935 = vadd.f32 %v861, %v929
  %v936 = vadd.f32 %v862, %v932
  %s937 = scalar_lea.vmem %s3, 108
  %v938 = vld [vmem:[%s937] sm:$0xf]
  %v939 = vld [vmem:[%s937 + $0x4] sm:$0xf]
  %v940 = vld [vmem:[%s937 + $0x8] sm:$0x1]
  %v941 = vunpack.c.l.bf16 %v938
  %v942 = vunpack.c.l.bf16 %v939
  %v943 = vunpack.c.l.bf16 %v940
  %944 = vmatpush.msra.mxu0 %v277
  %945 = vmatpush.msra.mxu0 %v276
  %946 = vmatpush.msra.mxu0 %v275
  %947 = vmatpush.msra.mxu0 %v274
  %948 = vmatpush.msra.mxu0 %v273
  %949 = vmatpush.msra.mxu0 %v272
  %950 = vmatpush.msra.mxu0 %v271
  %951 = vmatpush.msra.mxu0 %v270
  %952 = vmatpush.msra.mxu0 %v269
  %953 = vmatpush.msra.mxu0 %v268
  %954 = vmatpush.msra.mxu0 %v267
  %955 = vmatpush.msra.mxu0 %v266
  %956 = vmatpush.msra.mxu0 %v265
  %957 = vmatpush.msra.mxu0 %v264
  %958 = vmatpush.msra.mxu0 %v263
  %959 = vmatpush.msra.mxu0 %v262
  %960 = vmatmul.f32.gmra.mxu0 %v941
  %v961 = vpop.f32.mrf.mxu0
  %v962 = vadd.f32 0.0, %v961
  %963 = vmatmul.f32.gmra.mxu0 %v942
  %v964 = vpop.f32.mrf.mxu0
  %v965 = vadd.f32 0.0, %v964
  %966 = vmatmul.f32.gmra.mxu0 %v943
  %v967 = vpop.f32.mrf.mxu0
  %v968 = vadd.f32 0.0, %v967
  %969 = vdwg.mxu0
  %s970 = scalar_lea.vmem %s4, 144
  %v971 = vld [vmem:[%s970] sm:$0xff]
  %v972 = vld [vmem:[%s970 + $0x8] sm:$0xff]
  %v974 = vsel %vm348, %v962, 0
  %v977 = vsel %vm348, %v965, 0
  %v980 = vsel %vm348, %v968, 0
  %982 = vmatpush.msra.mxu0 0.0
  %983 = vmatpush.msra.mxu0 0.0
  %984 = vmatpush.msra.mxu0 0.0
  %985 = vmatpush.msra.mxu0 0.0
  %986 = vmatpush.msra.mxu0 0.0
  %987 = vmatpush.msra.mxu0 0.0
  %988 = vmatpush.msra.mxu0 0.0
  %989 = vmatpush.msra.mxu0 0.0
  %990 = vmatpush.msra.mxu0 0.0
  %991 = vmatpush.msra.mxu0 0.0
  %992 = vmatpush.msra.mxu0 0.0
  %993 = vmatpush.msra.mxu0 0.0
  %994 = vmatpush.msra.mxu0 0.0
  %995 = vmatpush.msra.mxu0 0.0
  %996 = vmatpush.msra.mxu0 %v972
  %997 = vmatpush.msra.mxu0 %v971
  %998 = vmatmul.f32.gmra.mxu0 %v974
  %v999 = vpop.f32.mrf.mxu0
  %v1000 = vadd.f32 0.0, %v999
  %1001 = vmatmul.f32.gmra.mxu0 %v977
  %v1002 = vpop.f32.mrf.mxu0
  %v1003 = vadd.f32 0.0, %v1002
  %1004 = vmatmul.f32.gmra.mxu0 %v980
  %v1005 = vpop.f32.mrf.mxu0
  %v1006 = vadd.f32 0.0, %v1005
  %1007 = vdwg.mxu0
  %v1008 = vadd.f32 %v934, %v1000
  %v1009 = vadd.f32 %v935, %v1003
  %v1010 = vadd.f32 %v936, %v1006
  %s1011 = scalar_lea.vmem %s3, 120
  %v1012 = vld [vmem:[%s1011] sm:$0xf]
  %v1013 = vld [vmem:[%s1011 + $0x4] sm:$0xf]
  %v1014 = vld [vmem:[%s1011 + $0x8] sm:$0x1]
  %v1015 = vunpack.c.l.bf16 %v1012
  %v1016 = vunpack.c.l.bf16 %v1013
  %v1017 = vunpack.c.l.bf16 %v1014
  %1018 = vmatpush.msra.mxu0 %v277
  %1019 = vmatpush.msra.mxu0 %v276
  %1020 = vmatpush.msra.mxu0 %v275
  %1021 = vmatpush.msra.mxu0 %v274
  %1022 = vmatpush.msra.mxu0 %v273
  %1023 = vmatpush.msra.mxu0 %v272
  %1024 = vmatpush.msra.mxu0 %v271
  %1025 = vmatpush.msra.mxu0 %v270
  %1026 = vmatpush.msra.mxu0 %v269
  %1027 = vmatpush.msra.mxu0 %v268
  %1028 = vmatpush.msra.mxu0 %v267
  %1029 = vmatpush.msra.mxu0 %v266
  %1030 = vmatpush.msra.mxu0 %v265
  %1031 = vmatpush.msra.mxu0 %v264
  %1032 = vmatpush.msra.mxu0 %v263
  %1033 = vmatpush.msra.mxu0 %v262
  %1034 = vmatmul.f32.gmra.mxu0 %v1015
  %v1035 = vpop.f32.mrf.mxu0
  %v1036 = vadd.f32 0.0, %v1035
  %1037 = vmatmul.f32.gmra.mxu0 %v1016
  %v1038 = vpop.f32.mrf.mxu0
  %v1039 = vadd.f32 0.0, %v1038
  %1040 = vmatmul.f32.gmra.mxu0 %v1017
  %v1041 = vpop.f32.mrf.mxu0
  %v1042 = vadd.f32 0.0, %v1041
  %1043 = vdwg.mxu0
  %s1044 = scalar_lea.vmem %s4, 160
  %v1045 = vld [vmem:[%s1044] sm:$0xff]
  %v1046 = vld [vmem:[%s1044 + $0x8] sm:$0xff]
  %v1048 = vsel %vm348, %v1036, 0
  %v1051 = vsel %vm348, %v1039, 0
  %v1054 = vsel %vm348, %v1042, 0
  %1056 = vmatpush.msra.mxu0 0.0
  %1057 = vmatpush.msra.mxu0 0.0
  %1058 = vmatpush.msra.mxu0 0.0
  %1059 = vmatpush.msra.mxu0 0.0
  %1060 = vmatpush.msra.mxu0 0.0
  %1061 = vmatpush.msra.mxu0 0.0
  %1062 = vmatpush.msra.mxu0 0.0
  %1063 = vmatpush.msra.mxu0 0.0
  %1064 = vmatpush.msra.mxu0 0.0
  %1065 = vmatpush.msra.mxu0 0.0
  %1066 = vmatpush.msra.mxu0 0.0
  %1067 = vmatpush.msra.mxu0 0.0
  %1068 = vmatpush.msra.mxu0 0.0
  %1069 = vmatpush.msra.mxu0 0.0
  %1070 = vmatpush.msra.mxu0 %v1046
  %1071 = vmatpush.msra.mxu0 %v1045
  %1072 = vmatmul.f32.gmra.mxu0 %v1048
  %v1073 = vpop.f32.mrf.mxu0
  %v1074 = vadd.f32 0.0, %v1073
  %1075 = vmatmul.f32.gmra.mxu0 %v1051
  %v1076 = vpop.f32.mrf.mxu0
  %v1077 = vadd.f32 0.0, %v1076
  %1078 = vmatmul.f32.gmra.mxu0 %v1054
  %v1079 = vpop.f32.mrf.mxu0
  %v1080 = vadd.f32 0.0, %v1079
  %1081 = vdwg.mxu0
  %v1082 = vadd.f32 %v1008, %v1074
  %v1083 = vadd.f32 %v1009, %v1077
  %v1084 = vadd.f32 %v1010, %v1080
  %s1085 = scalar_lea.vmem %s3, 132
  %v1086 = vld [vmem:[%s1085] sm:$0xf]
  %v1087 = vld [vmem:[%s1085 + $0x4] sm:$0xf]
  %v1088 = vld [vmem:[%s1085 + $0x8] sm:$0x1]
  %v1089 = vunpack.c.l.bf16 %v1086
  %v1090 = vunpack.c.l.bf16 %v1087
  %v1091 = vunpack.c.l.bf16 %v1088
  %1092 = vmatpush.msra.mxu0 %v277
  %1093 = vmatpush.msra.mxu0 %v276
  %1094 = vmatpush.msra.mxu0 %v275
  %1095 = vmatpush.msra.mxu0 %v274
  %1096 = vmatpush.msra.mxu0 %v273
  %1097 = vmatpush.msra.mxu0 %v272
  %1098 = vmatpush.msra.mxu0 %v271
  %1099 = vmatpush.msra.mxu0 %v270
  %1100 = vmatpush.msra.mxu0 %v269
  %1101 = vmatpush.msra.mxu0 %v268
  %1102 = vmatpush.msra.mxu0 %v267
  %1103 = vmatpush.msra.mxu0 %v266
  %1104 = vmatpush.msra.mxu0 %v265
  %1105 = vmatpush.msra.mxu0 %v264
  %1106 = vmatpush.msra.mxu0 %v263
  %1107 = vmatpush.msra.mxu0 %v262
  %1108 = vmatmul.f32.gmra.mxu0 %v1089
  %v1109 = vpop.f32.mrf.mxu0
  %v1110 = vadd.f32 0.0, %v1109
  %1111 = vmatmul.f32.gmra.mxu0 %v1090
  %v1112 = vpop.f32.mrf.mxu0
  %v1113 = vadd.f32 0.0, %v1112
  %1114 = vmatmul.f32.gmra.mxu0 %v1091
  %v1115 = vpop.f32.mrf.mxu0
  %v1116 = vadd.f32 0.0, %v1115
  %1117 = vdwg.mxu0
  %s1118 = scalar_lea.vmem %s4, 176
  %v1119 = vld [vmem:[%s1118] sm:$0xff]
  %v1120 = vld [vmem:[%s1118 + $0x8] sm:$0xff]
  %v1122 = vsel %vm348, %v1110, 0
  %v1125 = vsel %vm348, %v1113, 0
  %v1128 = vsel %vm348, %v1116, 0
  %1130 = vmatpush.msra.mxu0 0.0
  %1131 = vmatpush.msra.mxu0 0.0
  %1132 = vmatpush.msra.mxu0 0.0
  %1133 = vmatpush.msra.mxu0 0.0
  %1134 = vmatpush.msra.mxu0 0.0
  %1135 = vmatpush.msra.mxu0 0.0
  %1136 = vmatpush.msra.mxu0 0.0
  %1137 = vmatpush.msra.mxu0 0.0
  %1138 = vmatpush.msra.mxu0 0.0
  %1139 = vmatpush.msra.mxu0 0.0
  %1140 = vmatpush.msra.mxu0 0.0
  %1141 = vmatpush.msra.mxu0 0.0
  %1142 = vmatpush.msra.mxu0 0.0
  %1143 = vmatpush.msra.mxu0 0.0
  %1144 = vmatpush.msra.mxu0 %v1120
  %1145 = vmatpush.msra.mxu0 %v1119
  %1146 = vmatmul.f32.gmra.mxu0 %v1122
  %v1147 = vpop.f32.mrf.mxu0
  %v1148 = vadd.f32 0.0, %v1147
  %1149 = vmatmul.f32.gmra.mxu0 %v1125
  %v1150 = vpop.f32.mrf.mxu0
  %v1151 = vadd.f32 0.0, %v1150
  %1152 = vmatmul.f32.gmra.mxu0 %v1128
  %v1153 = vpop.f32.mrf.mxu0
  %v1154 = vadd.f32 0.0, %v1153
  %1155 = vdwg.mxu0
  %v1156 = vadd.f32 %v1082, %v1148
  %v1157 = vadd.f32 %v1083, %v1151
  %v1158 = vadd.f32 %v1084, %v1154
  %s1159 = scalar_lea.vmem %s3, 144
  %v1160 = vld [vmem:[%s1159] sm:$0xf]
  %v1161 = vld [vmem:[%s1159 + $0x4] sm:$0xf]
  %v1162 = vld [vmem:[%s1159 + $0x8] sm:$0x1]
  %v1163 = vunpack.c.l.bf16 %v1160
  %v1164 = vunpack.c.l.bf16 %v1161
  %v1165 = vunpack.c.l.bf16 %v1162
  %1166 = vmatpush.msra.mxu0 %v277
  %1167 = vmatpush.msra.mxu0 %v276
  %1168 = vmatpush.msra.mxu0 %v275
  %1169 = vmatpush.msra.mxu0 %v274
  %1170 = vmatpush.msra.mxu0 %v273
  %1171 = vmatpush.msra.mxu0 %v272
  %1172 = vmatpush.msra.mxu0 %v271
  %1173 = vmatpush.msra.mxu0 %v270
  %1174 = vmatpush.msra.mxu0 %v269
  %1175 = vmatpush.msra.mxu0 %v268
  %1176 = vmatpush.msra.mxu0 %v267
  %1177 = vmatpush.msra.mxu0 %v266
  %1178 = vmatpush.msra.mxu0 %v265
  %1179 = vmatpush.msra.mxu0 %v264
  %1180 = vmatpush.msra.mxu0 %v263
  %1181 = vmatpush.msra.mxu0 %v262
  %1182 = vmatmul.f32.gmra.mxu0 %v1163
  %v1183 = vpop.f32.mrf.mxu0
  %v1184 = vadd.f32 0.0, %v1183
  %1185 = vmatmul.f32.gmra.mxu0 %v1164
  %v1186 = vpop.f32.mrf.mxu0
  %v1187 = vadd.f32 0.0, %v1186
  %1188 = vmatmul.f32.gmra.mxu0 %v1165
  %v1189 = vpop.f32.mrf.mxu0
  %v1190 = vadd.f32 0.0, %v1189
  %1191 = vdwg.mxu0
  %s1192 = scalar_lea.vmem %s4, 192
  %v1193 = vld [vmem:[%s1192] sm:$0xff]
  %v1194 = vld [vmem:[%s1192 + $0x8] sm:$0xff]
  %v1196 = vsel %vm348, %v1184, 0
  %v1199 = vsel %vm348, %v1187, 0
  %v1202 = vsel %vm348, %v1190, 0
  %1204 = vmatpush.msra.mxu0 0.0
  %1205 = vmatpush.msra.mxu0 0.0
  %1206 = vmatpush.msra.mxu0 0.0
  %1207 = vmatpush.msra.mxu0 0.0
  %1208 = vmatpush.msra.mxu0 0.0
  %1209 = vmatpush.msra.mxu0 0.0
  %1210 = vmatpush.msra.mxu0 0.0
  %1211 = vmatpush.msra.mxu0 0.0
  %1212 = vmatpush.msra.mxu0 0.0
  %1213 = vmatpush.msra.mxu0 0.0
  %1214 = vmatpush.msra.mxu0 0.0
  %1215 = vmatpush.msra.mxu0 0.0
  %1216 = vmatpush.msra.mxu0 0.0
  %1217 = vmatpush.msra.mxu0 0.0
  %1218 = vmatpush.msra.mxu0 %v1194
  %1219 = vmatpush.msra.mxu0 %v1193
  %1220 = vmatmul.f32.gmra.mxu0 %v1196
  %v1221 = vpop.f32.mrf.mxu0
  %v1222 = vadd.f32 0.0, %v1221
  %1223 = vmatmul.f32.gmra.mxu0 %v1199
  %v1224 = vpop.f32.mrf.mxu0
  %v1225 = vadd.f32 0.0, %v1224
  %1226 = vmatmul.f32.gmra.mxu0 %v1202
  %v1227 = vpop.f32.mrf.mxu0
  %v1228 = vadd.f32 0.0, %v1227
  %1229 = vdwg.mxu0
  %v1230 = vadd.f32 %v1156, %v1222
  %v1231 = vadd.f32 %v1157, %v1225
  %v1232 = vadd.f32 %v1158, %v1228
  %s1233 = scalar_lea.vmem %s3, 156
  %v1234 = vld [vmem:[%s1233] sm:$0xf]
  %v1235 = vld [vmem:[%s1233 + $0x4] sm:$0xf]
  %v1236 = vld [vmem:[%s1233 + $0x8] sm:$0x1]
  %v1237 = vunpack.c.l.bf16 %v1234
  %v1238 = vunpack.c.l.bf16 %v1235
  %v1239 = vunpack.c.l.bf16 %v1236
  %1240 = vmatpush.msra.mxu0 %v277
  %1241 = vmatpush.msra.mxu0 %v276
  %1242 = vmatpush.msra.mxu0 %v275
  %1243 = vmatpush.msra.mxu0 %v274
  %1244 = vmatpush.msra.mxu0 %v273
  %1245 = vmatpush.msra.mxu0 %v272
  %1246 = vmatpush.msra.mxu0 %v271
  %1247 = vmatpush.msra.mxu0 %v270
  %1248 = vmatpush.msra.mxu0 %v269
  %1249 = vmatpush.msra.mxu0 %v268
  %1250 = vmatpush.msra.mxu0 %v267
  %1251 = vmatpush.msra.mxu0 %v266
  %1252 = vmatpush.msra.mxu0 %v265
  %1253 = vmatpush.msra.mxu0 %v264
  %1254 = vmatpush.msra.mxu0 %v263
  %1255 = vmatpush.msra.mxu0 %v262
  %1256 = vmatmul.f32.gmra.mxu0 %v1237
  %v1257 = vpop.f32.mrf.mxu0
  %v1258 = vadd.f32 0.0, %v1257
  %1259 = vmatmul.f32.gmra.mxu0 %v1238
  %v1260 = vpop.f32.mrf.mxu0
  %v1261 = vadd.f32 0.0, %v1260
  %1262 = vmatmul.f32.gmra.mxu0 %v1239
  %v1263 = vpop.f32.mrf.mxu0
  %v1264 = vadd.f32 0.0, %v1263
  %1265 = vdwg.mxu0
  %s1266 = scalar_lea.vmem %s4, 208
  %v1267 = vld [vmem:[%s1266] sm:$0xff]
  %v1268 = vld [vmem:[%s1266 + $0x8] sm:$0xff]
  %v1270 = vsel %vm348, %v1258, 0
  %v1273 = vsel %vm348, %v1261, 0
  %v1276 = vsel %vm348, %v1264, 0
  %1278 = vmatpush.msra.mxu0 0.0
  %1279 = vmatpush.msra.mxu0 0.0
  %1280 = vmatpush.msra.mxu0 0.0
  %1281 = vmatpush.msra.mxu0 0.0
  %1282 = vmatpush.msra.mxu0 0.0
  %1283 = vmatpush.msra.mxu0 0.0
  %1284 = vmatpush.msra.mxu0 0.0
  %1285 = vmatpush.msra.mxu0 0.0
  %1286 = vmatpush.msra.mxu0 0.0
  %1287 = vmatpush.msra.mxu0 0.0
  %1288 = vmatpush.msra.mxu0 0.0
  %1289 = vmatpush.msra.mxu0 0.0
  %1290 = vmatpush.msra.mxu0 0.0
  %1291 = vmatpush.msra.mxu0 0.0
  %1292 = vmatpush.msra.mxu0 %v1268
  %1293 = vmatpush.msra.mxu0 %v1267
  %1294 = vmatmul.f32.gmra.mxu0 %v1270
  %v1295 = vpop.f32.mrf.mxu0
  %v1296 = vadd.f32 0.0, %v1295
  %1297 = vmatmul.f32.gmra.mxu0 %v1273
  %v1298 = vpop.f32.mrf.mxu0
  %v1299 = vadd.f32 0.0, %v1298
  %1300 = vmatmul.f32.gmra.mxu0 %v1276
  %v1301 = vpop.f32.mrf.mxu0
  %v1302 = vadd.f32 0.0, %v1301
  %1303 = vdwg.mxu0
  %v1304 = vadd.f32 %v1230, %v1296
  %v1305 = vadd.f32 %v1231, %v1299
  %v1306 = vadd.f32 %v1232, %v1302
  %s1307 = scalar_lea.vmem %s3, 168
  %v1308 = vld [vmem:[%s1307] sm:$0xf]
  %v1309 = vld [vmem:[%s1307 + $0x4] sm:$0xf]
  %v1310 = vld [vmem:[%s1307 + $0x8] sm:$0x1]
  %v1311 = vunpack.c.l.bf16 %v1308
  %v1312 = vunpack.c.l.bf16 %v1309
  %v1313 = vunpack.c.l.bf16 %v1310
  %1314 = vmatpush.msra.mxu0 %v277
  %1315 = vmatpush.msra.mxu0 %v276
  %1316 = vmatpush.msra.mxu0 %v275
  %1317 = vmatpush.msra.mxu0 %v274
  %1318 = vmatpush.msra.mxu0 %v273
  %1319 = vmatpush.msra.mxu0 %v272
  %1320 = vmatpush.msra.mxu0 %v271
  %1321 = vmatpush.msra.mxu0 %v270
  %1322 = vmatpush.msra.mxu0 %v269
  %1323 = vmatpush.msra.mxu0 %v268
  %1324 = vmatpush.msra.mxu0 %v267
  %1325 = vmatpush.msra.mxu0 %v266
  %1326 = vmatpush.msra.mxu0 %v265
  %1327 = vmatpush.msra.mxu0 %v264
  %1328 = vmatpush.msra.mxu0 %v263
  %1329 = vmatpush.msra.mxu0 %v262
  %1330 = vmatmul.f32.gmra.mxu0 %v1311
  %v1331 = vpop.f32.mrf.mxu0
  %v1332 = vadd.f32 0.0, %v1331
  %1333 = vmatmul.f32.gmra.mxu0 %v1312
  %v1334 = vpop.f32.mrf.mxu0
  %v1335 = vadd.f32 0.0, %v1334
  %1336 = vmatmul.f32.gmra.mxu0 %v1313
  %v1337 = vpop.f32.mrf.mxu0
  %v1338 = vadd.f32 0.0, %v1337
  %1339 = vdwg.mxu0
  %s1340 = scalar_lea.vmem %s4, 224
  %v1341 = vld [vmem:[%s1340] sm:$0xff]
  %v1342 = vld [vmem:[%s1340 + $0x8] sm:$0xff]
  %v1344 = vsel %vm348, %v1332, 0
  %v1347 = vsel %vm348, %v1335, 0
  %v1350 = vsel %vm348, %v1338, 0
  %1352 = vmatpush.msra.mxu0 0.0
  %1353 = vmatpush.msra.mxu0 0.0
  %1354 = vmatpush.msra.mxu0 0.0
  %1355 = vmatpush.msra.mxu0 0.0
  %1356 = vmatpush.msra.mxu0 0.0
  %1357 = vmatpush.msra.mxu0 0.0
  %1358 = vmatpush.msra.mxu0 0.0
  %1359 = vmatpush.msra.mxu0 0.0
  %1360 = vmatpush.msra.mxu0 0.0
  %1361 = vmatpush.msra.mxu0 0.0
  %1362 = vmatpush.msra.mxu0 0.0
  %1363 = vmatpush.msra.mxu0 0.0
  %1364 = vmatpush.msra.mxu0 0.0
  %1365 = vmatpush.msra.mxu0 0.0
  %1366 = vmatpush.msra.mxu0 %v1342
  %1367 = vmatpush.msra.mxu0 %v1341
  %1368 = vmatmul.f32.gmra.mxu0 %v1344
  %v1369 = vpop.f32.mrf.mxu0
  %v1370 = vadd.f32 0.0, %v1369
  %1371 = vmatmul.f32.gmra.mxu0 %v1347
  %v1372 = vpop.f32.mrf.mxu0
  %v1373 = vadd.f32 0.0, %v1372
  %1374 = vmatmul.f32.gmra.mxu0 %v1350
  %v1375 = vpop.f32.mrf.mxu0
  %v1376 = vadd.f32 0.0, %v1375
  %1377 = vdwg.mxu0
  %v1378 = vadd.f32 %v1304, %v1370
  %v1379 = vadd.f32 %v1305, %v1373
  %v1380 = vadd.f32 %v1306, %v1376
  %s1381 = scalar_lea.vmem %s3, 180
  %v1382 = vld [vmem:[%s1381] sm:$0xf]
  %v1383 = vld [vmem:[%s1381 + $0x4] sm:$0xf]
  %v1384 = vld [vmem:[%s1381 + $0x8] sm:$0x1]
  %v1385 = vunpack.c.l.bf16 %v1382
  %v1386 = vunpack.c.l.bf16 %v1383
  %v1387 = vunpack.c.l.bf16 %v1384
  %1388 = vmatpush.msra.mxu0 %v277
  %1389 = vmatpush.msra.mxu0 %v276
  %1390 = vmatpush.msra.mxu0 %v275
  %1391 = vmatpush.msra.mxu0 %v274
  %1392 = vmatpush.msra.mxu0 %v273
  %1393 = vmatpush.msra.mxu0 %v272
  %1394 = vmatpush.msra.mxu0 %v271
  %1395 = vmatpush.msra.mxu0 %v270
  %1396 = vmatpush.msra.mxu0 %v269
  %1397 = vmatpush.msra.mxu0 %v268
  %1398 = vmatpush.msra.mxu0 %v267
  %1399 = vmatpush.msra.mxu0 %v266
  %1400 = vmatpush.msra.mxu0 %v265
  %1401 = vmatpush.msra.mxu0 %v264
  %1402 = vmatpush.msra.mxu0 %v263
  %1403 = vmatpush.msra.mxu0 %v262
  %1404 = vmatmul.f32.gmra.mxu0 %v1385
  %v1405 = vpop.f32.mrf.mxu0
  %v1406 = vadd.f32 0.0, %v1405
  %1407 = vmatmul.f32.gmra.mxu0 %v1386
  %v1408 = vpop.f32.mrf.mxu0
  %v1409 = vadd.f32 0.0, %v1408
  %1410 = vmatmul.f32.gmra.mxu0 %v1387
  %v1411 = vpop.f32.mrf.mxu0
  %v1412 = vadd.f32 0.0, %v1411
  %1413 = vdwg.mxu0
  %s1414 = scalar_lea.vmem %s4, 240
  %v1415 = vld [vmem:[%s1414] sm:$0xff]
  %v1416 = vld [vmem:[%s1414 + $0x8] sm:$0xff]
  %v1418 = vsel %vm348, %v1406, 0
  %v1421 = vsel %vm348, %v1409, 0
  %v1424 = vsel %vm348, %v1412, 0
  %1426 = vmatpush.msra.mxu0 0.0
  %1427 = vmatpush.msra.mxu0 0.0
  %1428 = vmatpush.msra.mxu0 0.0
  %1429 = vmatpush.msra.mxu0 0.0
  %1430 = vmatpush.msra.mxu0 0.0
  %1431 = vmatpush.msra.mxu0 0.0
  %1432 = vmatpush.msra.mxu0 0.0
  %1433 = vmatpush.msra.mxu0 0.0
  %1434 = vmatpush.msra.mxu0 0.0
  %1435 = vmatpush.msra.mxu0 0.0
  %1436 = vmatpush.msra.mxu0 0.0
  %1437 = vmatpush.msra.mxu0 0.0
  %1438 = vmatpush.msra.mxu0 0.0
  %1439 = vmatpush.msra.mxu0 0.0
  %1440 = vmatpush.msra.mxu0 %v1416
  %1441 = vmatpush.msra.mxu0 %v1415
  %1442 = vmatmul.f32.gmra.mxu0 %v1418
  %v1443 = vpop.f32.mrf.mxu0
  %v1444 = vadd.f32 0.0, %v1443
  %1445 = vmatmul.f32.gmra.mxu0 %v1421
  %v1446 = vpop.f32.mrf.mxu0
  %v1447 = vadd.f32 0.0, %v1446
  %1448 = vmatmul.f32.gmra.mxu0 %v1424
  %v1449 = vpop.f32.mrf.mxu0
  %v1450 = vadd.f32 0.0, %v1449
  %1451 = vdwg.mxu0
  %v1452 = vadd.f32 %v1378, %v1444
  %v1453 = vadd.f32 %v1379, %v1447
  %v1454 = vadd.f32 %v1380, %v1450
  %v1455 = vld [vmem:[%s5] sm:$0x1]
  %v1457 = vperm.slane %v1455, 0
  %v1459 = vadd.f32 %v1452, %v1457
  %v1460 = vadd.f32 %v1453, %v1457
  %v1461 = vadd.f32 %v1454, %v1457
  %v1462 = vmax.f32 %v1459, 0.0
  %v1463 = vmax.f32 %v1460, 0.0
  %v1464 = vmax.f32 %v1461, 0.0
  %vm1465 = vcmask 261120
  %1466 = vst.msk [vmem:[%s6] sm:$0xff] %vm1465, %v1462
  %1467 = vst.msk [vmem:[%s6 + $0x8] sm:$0xff] %vm1465, %v1463
  %vm1468 = vcmask 254976
  %1469 = vst.msk [vmem:[%s6 + $0x10] sm:$0x3] %vm1468, %v1464
  // Predicated region
  $region26: #{cnn_forward.1} parent=0 // pred_check
    _
  $region27: #{cnn_forward.1} parent=0 // pred_check_branch
    %1471 = sbr.rel (0) target = $region29
  $region28: #{cnn_forward.1} parent=0 // pred_region
    _
  $region29: #{cnn_forward.1} parent=0 // pred_fallthru
    _
  // Predicated region
  $region30: #{cnn_forward.1} parent=0 // pred_check
    _
  $region31: #{cnn_forward.1} parent=0 // pred_check_branch
    %1473 = sbr.rel (0) target = $region33
  $region32: #{cnn_forward.1} parent=0 // pred_region
    _
  $region33: #{cnn_forward.1} parent=0 // pred_fallthru
    _

</llo_original>
